<compile_context>
chip_gen: v6e
topology: v6e:2x2x1
jax: 0.10.0
libtpu: 0.0.40
codegen_flags: <defaults>
</compile_context>

<pallas_src>
import numpy as np

import jax
import jax.numpy as jnp
from jax.experimental import pallas as pl
from jax.experimental.pallas import tpu as pltpu

BN_EPS = 1e-5


# ---------------------------------------------------------------------------
# helpers traced inside the kernel
# ---------------------------------------------------------------------------
def _shift_lanes(a, s):
    """Cyclic left shift along the last (lane) axis: out[..., n] = a[..., (n+s) % N].

    Implemented as slice+concatenate (unambiguous semantics; Mosaic lowers this
    to lane rotates).
    """
    n = a.shape[-1]
    s = s % n
    if s == 0:
        return a
    return jnp.concatenate([a[..., s:], a[..., :s]], axis=-1)


def _im2col(x, dys, dxs, row_stride):
    """x: (R, N) channel-major activation, N = B*H*W flattened batch-major.

    Returns (len(dxs)*len(dys)*R, N) with
      out[(dxi*len(dys) + dyi)*R + r, n] = x[r, (n + dy*row_stride + dx) mod N].
    Out-of-image taps are zeroed by the caller via a precomputed 0/1 mask.
    """
    col = jnp.concatenate([_shift_lanes(x, dy * row_stride) for dy in dys], axis=0)
    return jnp.concatenate([_shift_lanes(col, dx) for dx in dxs], axis=0)


# ---------------------------------------------------------------------------
# shape-only constants (wrapper side, numpy)
# ---------------------------------------------------------------------------
def _tap_mask(bsz, h, w, rows_per_tap, dys, dxs):
    """0/1 float mask matching _im2col's row order (zero for out-of-image taps)."""
    n = bsz * h * w
    hh = (np.arange(n) // w) % h
    ww = np.arange(n) % w
    blocks = []
    for dx in dxs:
        for dy in dys:
            ok = ((hh + dy >= 0) & (hh + dy < h) &
                  (ww + dx >= 0) & (ww + dx < w)).astype(np.float32)
            blocks.append(np.repeat(ok[None, :], rows_per_tap, axis=0))
    return jnp.asarray(np.concatenate(blocks, axis=0))


# ---------------------------------------------------------------------------
# Pallas kernel + wrapper
# ---------------------------------------------------------------------------
def cbam_feature_mapping(x_nchw, params):
    """x_nchw: (B, C, H, W) float32 -> (B, num_classes) float32."""
    x = x_nchw.astype(jnp.float32)
    bsz, c, h, w = x.shape
    n = bsz * h * w
    hw = h * w
    ph, pw = h // 2, w // 2
    npool = ph * pw
    ncls = params["fc_b"].shape[-1]

    # ---- parameter plumbing: fold BN into convs, repack channel-major ----
    wmats, bvecs = [], []
    for i in range(3):
        gamma, beta, mean, var = params["bnp"][i]
        scale = gamma * jax.lax.rsqrt(var + BN_EPS)                      # (Cout,)
        wmat = (jnp.transpose(params["convw"][i], (3, 1, 0, 2))          # (co,kx,ky,ci)
                .reshape(c, 9 * c) * scale[:, None])
        bvec = ((params["convb"][i] - mean) * scale + beta)[:, None]     # (Cout,1)
        wmats.append(wmat)
        bvecs.append(bvec)
    # convbn1 and convbn3 consume the same im2col of x -> stack for one matmul.
    w13 = jnp.concatenate([wmats[0], wmats[2]], axis=0)                  # (2C, 9C)
    b13 = jnp.concatenate([bvecs[0], bvecs[2]], axis=0)                  # (2C, 1)

    gamma4, beta4, mean4, var4 = params["bnp"][3]
    scale4 = gamma4 * jax.lax.rsqrt(var4 + BN_EPS)
    bn4_scale = scale4[:, None]
    bn4_shift = (beta4 - mean4 * scale4)[:, None]

    ca_w1_t = params["ca_w1"].T                                          # (hidden, C)
    ca_w2_t = params["ca_w2"].T                                          # (C, hidden)
    sa_wvec = jnp.transpose(params["sa_w"], (1, 0, 2)).reshape(1, 7 * 7 * 2)
    sa_b = params["sa_b"].reshape(1, 1)
    fc_w_t = params["fc_w"].T                                            # (ncls, C*PH*PW)
    fc_b_t = params["fc_b"].reshape(ncls, 1)

    # ---- static layout constants (no runtime compute) ----
    mask3 = _tap_mask(bsz, h, w, c, (-1, 0, 1), (-1, 0, 1))                     # (9C, N)
    mask7 = _tap_mask(bsz, h, w, 2, tuple(range(-3, 4)), tuple(range(-3, 4)))   # (98, N)
    seg_np = (np.arange(n)[None, :] // hw == np.arange(bsz)[:, None]).astype(np.float32)
    seg = jnp.asarray(seg_np)                                                   # (B, N)
    seg_t = jnp.asarray(seg_np.T.copy())                                        # (N, B)
    lift = jnp.asarray(np.kron(np.eye(c), np.ones((npool, 1))).astype(np.float32))
    anchors = (np.arange(npool) // pw) * (2 * w) + (np.arange(npool) % pw) * 2
    pick = jnp.asarray(
        (np.tile(anchors, c)[:, None] == (np.arange(n) % hw)[None, :]).astype(np.float32))

    # channel-major, lane-dense input: (C, B*H*W)
    x_cm = jnp.transpose(x, (1, 0, 2, 3)).reshape(c, n)

    def kernel(x_ref, mask3_ref, mask7_ref,
               w13_ref, b13_ref, w2_ref, b2_ref,
               caw1_ref, caw2_ref, seg_ref, segt_ref,
               saw_ref, sab_ref, bn4s_ref, bn4b_ref,
               lift_ref, pick_ref, fcw_ref, fcb_ref, out_ref):
        f32 = jnp.float32
        xin = x_ref[...]                       # (C, N)
        m3 = mask3_ref[...]                    # (9C, N)
        segm = seg_ref[...]                    # (B, N)
        segt = segt_ref[...]                   # (N, B)

        # ---- ResBlock (BN folded into conv weights) ----
        # convbn1 and convbn3 share the same im2col patch -> one stacked matmul.
        px = _im2col(xin, (-1, 0, 1), (-1, 0, 1), w) * m3                  # (9C, N)
        hr = jnp.maximum(
            jnp.dot(w13_ref[...], px, preferred_element_type=f32) + b13_ref[...], 0.0)
        h1 = hr[:c, :]                                                      # convbn1(x)
        res = hr[c:, :]                                                     # convbn3(x)
        p1 = _im2col(h1, (-1, 0, 1), (-1, 0, 1), w) * m3
        h2 = jnp.maximum(
            jnp.dot(w2_ref[...], p1, preferred_element_type=f32) + b2_ref[...], 0.0)
        y = h2 + res                                                        # (C, N)

        # ---- CBAM channel attention (avg & max descriptors, shared MLP) ----
        avg_cb = jnp.dot(y, segt, preferred_element_type=f32) * (1.0 / hw)  # (C, B)
        max_cb = jnp.concatenate(
            [jnp.max(jnp.where(segm[bi:bi + 1, :] > 0.5, y, -1e30),
                     axis=1, keepdims=True) for bi in range(bsz)], axis=1)  # (C, B)
        desc = jnp.concatenate([avg_cb, max_cb], axis=1)                    # (C, 2B)
        hid = jnp.maximum(
            jnp.dot(caw1_ref[...], desc, preferred_element_type=f32), 0.0)  # (hid, 2B)
        mlp = jnp.dot(caw2_ref[...], hid, preferred_element_type=f32)       # (C, 2B)
        ca = jax.nn.sigmoid(mlp[:, :bsz] + mlp[:, bsz:])                    # (C, B)
        y = y * jnp.dot(ca, segm, preferred_element_type=f32)   # broadcast per batch seg

        # ---- CBAM spatial attention: 7x7 conv as one (1x98) matmul ----
        sa_in = jnp.concatenate([jnp.mean(y, axis=0, keepdims=True),
                                 jnp.max(y, axis=0, keepdims=True)], axis=0)  # (2, N)
        p7 = _im2col(sa_in, tuple(range(-3, 4)), tuple(range(-3, 4)), w) * mask7_ref[...]
        sa = jax.nn.sigmoid(
            jnp.dot(saw_ref[...], p7, preferred_element_type=f32) + sab_ref[...])  # (1, N)
        y = y * sa

        # ---- final BatchNorm: single FMA ----
        y = y * bn4s_ref[...] + bn4b_ref[...]

        # ---- MaxPool2d(2): two lane shifts + vmax (anchors never cross bounds) ----
        mrow = jnp.maximum(y, _shift_lanes(y, 1))
        mpool = jnp.maximum(mrow, _shift_lanes(mrow, w))        # (C, N), valid at anchors

        # ---- anchor gather + CHW flatten + Linear, all as matmuls ----
        big = jnp.dot(lift_ref[...], mpool, preferred_element_type=f32)        # (C*PHPW, N)
        flat = jnp.dot(big * pick_ref[...], segt, preferred_element_type=f32)  # (C*PHPW, B)
        out_ref[...] = (jnp.dot(fcw_ref[...], flat, preferred_element_type=f32)
                        + fcb_ref[...]).astype(out_ref.dtype)

    args = (x_cm, mask3, mask7,
            w13, b13, wmats[1], bvecs[1],
            ca_w1_t, ca_w2_t, seg, seg_t,
            sa_wvec, sa_b, bn4_scale, bn4_shift,
            lift, pick, fc_w_t, fc_b_t)
    vmem = pl.BlockSpec(memory_space=pltpu.MemorySpace.VMEM)
    out_cm = pl.pallas_call(
        kernel,
        out_shape=jax.ShapeDtypeStruct((ncls, bsz), jnp.float32),
        in_specs=[vmem] * len(args),
        out_specs=vmem,
    )(*args)
    return out_cm.T                                             # (B, num_classes)


# ---------------------------------------------------------------------------
# pure-JAX (XLA) reference in NHWC, independent of the kernel formulation
# ---------------------------------------------------------------------------
def _pad_hw(x, p):
    b, h, wd, c = x.shape
    zr = jnp.zeros((b, p, wd, c), x.dtype)
    x = jnp.concatenate([zr, x, zr], axis=1)
    zc = jnp.zeros((b, h + 2 * p, p, c), x.dtype)
    return jnp.concatenate([zc, x, zc], axis=2)


def _conv3x3(x, w, b):
    bsz, h, wd, cin = x.shape
    cout = w.shape[-1]
    xp = _pad_hw(x, 1)
    acc = jnp.zeros((bsz * h * wd, cout), jnp.float32)
    for dy in range(3):
        for dx in range(3):
            patch = xp[:, dy:dy + h, dx:dx + wd, :].reshape(bsz * h * wd, cin)
            acc = acc + jnp.dot(patch, w[dy, dx], preferred_element_type=jnp.float32)
    return acc.reshape(bsz, h, wd, cout) + b


def _conv7x7_2to1(x2, w, b11):
    bsz, h, wd, _ = x2.shape
    xp = _pad_hw(x2, 3)
    acc = jnp.zeros((bsz, h, wd), jnp.float32)
    for dy in range(7):
        for dx in range(7):
            acc = acc + jnp.sum(xp[:, dy:dy + h, dx:dx + wd, :] * w[dy, dx], axis=-1)
    return acc + b11


def _bn(x, g, bta, mean, var):
    return (x - mean) * (g * jax.lax.rsqrt(var + BN_EPS)) + bta


def reference_forward(x_nchw, params):
    x = jnp.transpose(x_nchw, (0, 2, 3, 1)).astype(jnp.float32)   # NHWC
    bsz, h, wd, c = x.shape

    def cbn(v, i):
        y = _conv3x3(v, params["convw"][i], params["convb"][i])
        p = params["bnp"][i]
        return jnp.maximum(_bn(y, p[0], p[1], p[2], p[3]), 0.0)

    y = cbn(cbn(x, 0), 1) + cbn(x, 2)

    # channel attention
    y3 = y.reshape(bsz, h * wd, c)
    avg_c = jnp.mean(y3, axis=1)
    max_c = jnp.max(y3, axis=1)

    def mlp(v):
        hid = jnp.maximum(jnp.dot(v, params["ca_w1"]), 0.0)
        return jnp.dot(hid, params["ca_w2"])

    ca = jax.nn.sigmoid(mlp(avg_c) + mlp(max_c))
    y = y * ca[:, None, None, :]

    # spatial attention
    sa_in = jnp.concatenate([jnp.mean(y, axis=-1, keepdims=True),
                             jnp.max(y, axis=-1, keepdims=True)], axis=-1)
    sa = jax.nn.sigmoid(_conv7x7_2to1(sa_in, params["sa_w"], params["sa_b"]))
    y = y * sa[..., None]

    # final BN
    p = params["bnp"][3]
    y = _bn(y, p[0], p[1], p[2], p[3])

    # maxpool(2) + CHW flatten (PyTorch order) + fc
    pooled = y.reshape(bsz, h // 2, 2, wd // 2, 2, c).max(axis=(2, 4))   # (B,H/2,W/2,C)
    flat = jnp.transpose(pooled, (0, 3, 1, 2)).reshape(bsz, -1)          # (B, C*PH*PW)
    return jnp.dot(flat, params["fc_w"]) + params["fc_b"]


# ---------------------------------------------------------------------------
# main
# ---------------------------------------------------------------------------
if __name__ == "__main__":
    B, C, H, W = 2, 4, 8, 8      # fc expects in_channels * 4 * 4 => input spatial 8x8
    NUM_CLASSES = 10
    HIDDEN = max(1, C // 2)      # CBAM channel-attention reduction (C is tiny)

    key = jax.random.PRNGKey(0)
    ks = jax.random.split(key, 11)

    gamma = 1.0 + 0.1 * jax.random.normal(ks[2], (4, C), jnp.float32)
    beta = 0.1 * jax.random.normal(ks[3], (4, C), jnp.float32)
    mean = 0.1 * jax.random.normal(ks[4], (4, C), jnp.float32)
    var = 1.0 + 0.1 * jnp.abs(jax.random.normal(ks[5], (4, C), jnp.float32))

    params = {
        # (conv_idx, ky, kx, cin, cout) for the three ResBlock 3x3 convs
        "convw": 0.1 * jax.random.normal(ks[0], (3, 3, 3, C, C), jnp.float32),
        "convb": 0.05 * jax.random.normal(ks[1], (3, C), jnp.float32),
        # (bn_idx [cbn1,cbn2,cbn3,final], param [gamma,beta,mean,var], C)
        "bnp": jnp.stack([gamma, beta, mean, var], axis=1),
        # CBAM channel-attention shared MLP (no bias, canonical CBAM)
        "ca_w1": 0.2 * jax.random.normal(ks[6], (C, HIDDEN), jnp.float32),
        "ca_w2": 0.2 * jax.random.normal(ks[7], (HIDDEN, C), jnp.float32),
        # CBAM spatial-attention 7x7 conv (2 -> 1 channel) + bias
        "sa_w": 0.1 * jax.random.normal(ks[8], (7, 7, 2), jnp.float32),
        "sa_b": jnp.full((1, 1), 0.01, jnp.float32),
        # Linear: rows in PyTorch CHW-flatten order, shape (C*4*4, num_classes)
        "fc_w": 0.1 * jax.random.normal(ks[9], (C * (H // 2) * (W // 2), NUM_CLASSES),
                                        jnp.float32),
        "fc_b": 0.05 * jnp.ones((1, NUM_CLASSES), jnp.float32),
    }

    x = jax.random.normal(ks[10], (B, C, H, W), jnp.float32)  # NCHW like PyTorch

    out = jax.block_until_ready(cbam_feature_mapping(x, params))
    ref = jax.block_until_ready(reference_forward(x, params))

    assert out.shape == (B, NUM_CLASSES), out.shape
    assert bool(jnp.all(jnp.isfinite(out)))
    assert bool(jnp.allclose(out, ref, atol=5e-2, rtol=5e-2)), (out, ref)

    print("KERNEL_OK")
</pallas_src>

<mosaic_0001>
module attributes {stable_mosaic.version = 11 : i64} {
  func.func @kernel(%arg0: memref<4x128xf32, #tpu.memory_space<vmem>>, %arg1: memref<36x128xf32, #tpu.memory_space<vmem>>, %arg2: memref<98x128xf32, #tpu.memory_space<vmem>>, %arg3: memref<8x36xf32, #tpu.memory_space<vmem>>, %arg4: memref<8x1xf32, #tpu.memory_space<vmem>>, %arg5: memref<4x36xf32, #tpu.memory_space<vmem>>, %arg6: memref<4x1xf32, #tpu.memory_space<vmem>>, %arg7: memref<2x4xf32, #tpu.memory_space<vmem>>, %arg8: memref<4x2xf32, #tpu.memory_space<vmem>>, %arg9: memref<2x128xf32, #tpu.memory_space<vmem>>, %arg10: memref<128x2xf32, #tpu.memory_space<vmem>>, %arg11: memref<1x98xf32, #tpu.memory_space<vmem>>, %arg12: memref<1x1xf32, #tpu.memory_space<vmem>>, %arg13: memref<4x1xf32, #tpu.memory_space<vmem>>, %arg14: memref<4x1xf32, #tpu.memory_space<vmem>>, %arg15: memref<64x4xf32, #tpu.memory_space<vmem>>, %arg16: memref<64x128xf32, #tpu.memory_space<vmem>>, %arg17: memref<10x64xf32, #tpu.memory_space<vmem>>, %arg18: memref<10x1xf32, #tpu.memory_space<vmem>>, %arg19: memref<10x2xf32, #tpu.memory_space<vmem>>) attributes {dimension_semantics = [], scalar_prefetch = 0 : i64, scratch_operands = 0 : i64, tpu.core_type = #tpu.core_type<tc>} {
    %c0 = arith.constant 0 : index
    %c0_0 = arith.constant 0 : index
    %0 = vector.load %arg0[%c0, %c0_0] : memref<4x128xf32, #tpu.memory_space<vmem>>, vector<4x128xf32>
    %c0_1 = arith.constant 0 : index
    %c0_2 = arith.constant 0 : index
    %1 = vector.load %arg1[%c0_1, %c0_2] : memref<36x128xf32, #tpu.memory_space<vmem>>, vector<36x128xf32>
    %c0_3 = arith.constant 0 : index
    %c0_4 = arith.constant 0 : index
    %2 = vector.load %arg9[%c0_3, %c0_4] : memref<2x128xf32, #tpu.memory_space<vmem>>, vector<2x128xf32>
    %c0_5 = arith.constant 0 : index
    %c0_6 = arith.constant 0 : index
    %3 = vector.load %arg10[%c0_5, %c0_6] : memref<128x2xf32, #tpu.memory_space<vmem>>, vector<128x2xf32>
    %4 = vector.extract_strided_slice %0 {offsets = [0, 120], sizes = [4, 8], strides = [1, 1]} : vector<4x128xf32> to vector<4x8xf32>
    %5 = vector.extract_strided_slice %0 {offsets = [0, 0], sizes = [4, 120], strides = [1, 1]} : vector<4x128xf32> to vector<4x120xf32>
    %6 = tpu.concatenate %4, %5 in 1 : vector<4x8xf32>, vector<4x120xf32> -> vector<4x128xf32>
    %7 = vector.extract_strided_slice %0 {offsets = [0, 8], sizes = [4, 120], strides = [1, 1]} : vector<4x128xf32> to vector<4x120xf32>
    %8 = vector.extract_strided_slice %0 {offsets = [0, 0], sizes = [4, 8], strides = [1, 1]} : vector<4x128xf32> to vector<4x8xf32>
    %9 = tpu.concatenate %7, %8 in 1 : vector<4x120xf32>, vector<4x8xf32> -> vector<4x128xf32>
    %10 = tpu.concatenate %6, %0, %9 in 0 : vector<4x128xf32>, vector<4x128xf32>, vector<4x128xf32> -> vector<12x128xf32>
    %11 = vector.extract_strided_slice %10 {offsets = [0, 127], sizes = [12, 1], strides = [1, 1]} : vector<12x128xf32> to vector<12x1xf32>
    %12 = vector.extract_strided_slice %10 {offsets = [0, 0], sizes = [12, 127], strides = [1, 1]} : vector<12x128xf32> to vector<12x127xf32>
    %13 = tpu.concatenate %11, %12 in 1 : vector<12x1xf32>, vector<12x127xf32> -> vector<12x128xf32>
    %14 = vector.extract_strided_slice %10 {offsets = [0, 1], sizes = [12, 127], strides = [1, 1]} : vector<12x128xf32> to vector<12x127xf32>
    %15 = vector.extract_strided_slice %10 {offsets = [0, 0], sizes = [12, 1], strides = [1, 1]} : vector<12x128xf32> to vector<12x1xf32>
    %16 = tpu.concatenate %14, %15 in 1 : vector<12x127xf32>, vector<12x1xf32> -> vector<12x128xf32>
    %17 = tpu.concatenate %13, %10, %16 in 0 : vector<12x128xf32>, vector<12x128xf32>, vector<12x128xf32> -> vector<36x128xf32>
    %18 = arith.mulf %17, %1 : vector<36x128xf32>
    %c0_7 = arith.constant 0 : index
    %c0_8 = arith.constant 0 : index
    %19 = vector.load %arg3[%c0_7, %c0_8] : memref<8x36xf32, #tpu.memory_space<vmem>>, vector<8x36xf32>
    %cst = arith.constant dense<0.000000e+00> : vector<8x128xf32>
    %20 = tpu.matmul %19, %18, %cst {dimension_numbers = #tpu.dot_dimension_numbers<[1], [0], [0], [1], [0, 0, 1, 1], [], []>} : vector<8x36xf32>, vector<36x128xf32>, vector<8x128xf32> -> vector<8x128xf32>
    %c0_9 = arith.constant 0 : index
    %c0_10 = arith.constant 0 : index
    %21 = vector.load %arg4[%c0_9, %c0_10] : memref<8x1xf32, #tpu.memory_space<vmem>>, vector<8x1xf32>
    %22 = vector.broadcast %21 : vector<8x1xf32> to vector<8x128xf32>
    %23 = arith.addf %20, %22 : vector<8x128xf32>
    %cst_11 = arith.constant 0.000000e+00 : f32
    %24 = vector.broadcast %cst_11 : f32 to vector<8x128xf32>
    %25 = arith.maximumf %23, %24 : vector<8x128xf32>
    %26 = vector.extract_strided_slice %25 {offsets = [0, 0], sizes = [4, 128], strides = [1, 1]} : vector<8x128xf32> to vector<4x128xf32>
    %27 = vector.extract_strided_slice %25 {offsets = [4, 0], sizes = [4, 128], strides = [1, 1]} : vector<8x128xf32> to vector<4x128xf32>
    %28 = vector.extract_strided_slice %26 {offsets = [0, 120], sizes = [4, 8], strides = [1, 1]} : vector<4x128xf32> to vector<4x8xf32>
    %29 = vector.extract_strided_slice %26 {offsets = [0, 0], sizes = [4, 120], strides = [1, 1]} : vector<4x128xf32> to vector<4x120xf32>
    %30 = tpu.concatenate %28, %29 in 1 : vector<4x8xf32>, vector<4x120xf32> -> vector<4x128xf32>
    %31 = vector.extract_strided_slice %26 {offsets = [0, 8], sizes = [4, 120], strides = [1, 1]} : vector<4x128xf32> to vector<4x120xf32>
    %32 = vector.extract_strided_slice %26 {offsets = [0, 0], sizes = [4, 8], strides = [1, 1]} : vector<4x128xf32> to vector<4x8xf32>
    %33 = tpu.concatenate %31, %32 in 1 : vector<4x120xf32>, vector<4x8xf32> -> vector<4x128xf32>
    %34 = tpu.concatenate %30, %26, %33 in 0 : vector<4x128xf32>, vector<4x128xf32>, vector<4x128xf32> -> vector<12x128xf32>
    %35 = vector.extract_strided_slice %34 {offsets = [0, 127], sizes = [12, 1], strides = [1, 1]} : vector<12x128xf32> to vector<12x1xf32>
    %36 = vector.extract_strided_slice %34 {offsets = [0, 0], sizes = [12, 127], strides = [1, 1]} : vector<12x128xf32> to vector<12x127xf32>
    %37 = tpu.concatenate %35, %36 in 1 : vector<12x1xf32>, vector<12x127xf32> -> vector<12x128xf32>
    %38 = vector.extract_strided_slice %34 {offsets = [0, 1], sizes = [12, 127], strides = [1, 1]} : vector<12x128xf32> to vector<12x127xf32>
    %39 = vector.extract_strided_slice %34 {offsets = [0, 0], sizes = [12, 1], strides = [1, 1]} : vector<12x128xf32> to vector<12x1xf32>
    %40 = tpu.concatenate %38, %39 in 1 : vector<12x127xf32>, vector<12x1xf32> -> vector<12x128xf32>
    %41 = tpu.concatenate %37, %34, %40 in 0 : vector<12x128xf32>, vector<12x128xf32>, vector<12x128xf32> -> vector<36x128xf32>
    %42 = arith.mulf %41, %1 : vector<36x128xf32>
    %c0_12 = arith.constant 0 : index
    %c0_13 = arith.constant 0 : index
    %43 = vector.load %arg5[%c0_12, %c0_13] : memref<4x36xf32, #tpu.memory_space<vmem>>, vector<4x36xf32>
    %cst_14 = arith.constant dense<0.000000e+00> : vector<4x128xf32>
    %44 = tpu.matmul %43, %42, %cst_14 {dimension_numbers = #tpu.dot_dimension_numbers<[1], [0], [0], [1], [0, 0, 1, 1], [], []>} : vector<4x36xf32>, vector<36x128xf32>, vector<4x128xf32> -> vector<4x128xf32>
    %c0_15 = arith.constant 0 : index
    %c0_16 = arith.constant 0 : index
    %45 = vector.load %arg6[%c0_15, %c0_16] : memref<4x1xf32, #tpu.memory_space<vmem>>, vector<4x1xf32>
    %46 = vector.broadcast %45 : vector<4x1xf32> to vector<4x128xf32>
    %47 = arith.addf %44, %46 : vector<4x128xf32>
    %cst_17 = arith.constant 0.000000e+00 : f32
    %48 = vector.broadcast %cst_17 : f32 to vector<4x128xf32>
    %49 = arith.maximumf %47, %48 : vector<4x128xf32>
    %50 = arith.addf %49, %27 : vector<4x128xf32>
    %cst_18 = arith.constant dense<0.000000e+00> : vector<4x2xf32>
    %51 = tpu.matmul %50, %3, %cst_18 {dimension_numbers = #tpu.dot_dimension_numbers<[1], [0], [0], [1], [0, 0, 1, 1], [], []>} : vector<4x128xf32>, vector<128x2xf32>, vector<4x2xf32> -> vector<4x2xf32>
    %cst_19 = arith.constant 1.562500e-02 : f32
    %52 = vector.broadcast %cst_19 : f32 to vector<4x2xf32>
    %53 = arith.mulf %51, %52 : vector<4x2xf32>
    %54 = vector.extract_strided_slice %2 {offsets = [0, 0], sizes = [1, 128], strides = [1, 1]} : vector<2x128xf32> to vector<1x128xf32>
    %cst_20 = arith.constant 5.000000e-01 : f32
    %55 = vector.broadcast %cst_20 : f32 to vector<1x128xf32>
    %56 = arith.cmpf ogt, %54, %55 : vector<1x128xf32>
    %cst_21 = arith.constant -1.000000e+30 : f32
    %57 = vector.shape_cast %56 : vector<1x128xi1> to vector<1x128xi1>
    %58 = vector.broadcast %57 : vector<1x128xi1> to vector<4x128xi1>
    %59 = vector.broadcast %cst_21 : f32 to vector<4x128xf32>
    %60 = arith.select %58, %50, %59 : vector<4x128xi1>, vector<4x128xf32>
    %cst_22 = arith.constant dense<0xFF800000> : vector<4xf32>
    %61 = vector.multi_reduction <maximumf>, %60, %cst_22 [1] : vector<4x128xf32> to vector<4xf32>
    %62 = vector.shape_cast %61 : vector<4xf32> to vector<4x1xf32>
    %63 = vector.extract_strided_slice %2 {offsets = [1, 0], sizes = [1, 128], strides = [1, 1]} : vector<2x128xf32> to vector<1x128xf32>
    %cst_23 = arith.constant 5.000000e-01 : f32
    %64 = vector.broadcast %cst_23 : f32 to vector<1x128xf32>
    %65 = arith.cmpf ogt, %63, %64 : vector<1x128xf32>
    %cst_24 = arith.constant -1.000000e+30 : f32
    %66 = vector.shape_cast %65 : vector<1x128xi1> to vector<1x128xi1>
    %67 = vector.broadcast %66 : vector<1x128xi1> to vector<4x128xi1>
    %68 = vector.broadcast %cst_24 : f32 to vector<4x128xf32>
    %69 = arith.select %67, %50, %68 : vector<4x128xi1>, vector<4x128xf32>
    %cst_25 = arith.constant dense<0xFF800000> : vector<4xf32>
    %70 = vector.multi_reduction <maximumf>, %69, %cst_25 [1] : vector<4x128xf32> to vector<4xf32>
    %71 = vector.shape_cast %70 : vector<4xf32> to vector<4x1xf32>
    %72 = tpu.concatenate %62, %71 in 1 : vector<4x1xf32>, vector<4x1xf32> -> vector<4x2xf32>
    %73 = tpu.concatenate %53, %72 in 1 : vector<4x2xf32>, vector<4x2xf32> -> vector<4x4xf32>
    %c0_26 = arith.constant 0 : index
    %c0_27 = arith.constant 0 : index
    %74 = vector.load %arg7[%c0_26, %c0_27] : memref<2x4xf32, #tpu.memory_space<vmem>>, vector<2x4xf32>
    %cst_28 = arith.constant dense<0.000000e+00> : vector<2x4xf32>
    %75 = tpu.matmul %74, %73, %cst_28 {dimension_numbers = #tpu.dot_dimension_numbers<[1], [0], [0], [1], [0, 0, 1, 1], [], []>} : vector<2x4xf32>, vector<4x4xf32>, vector<2x4xf32> -> vector<2x4xf32>
    %cst_29 = arith.constant 0.000000e+00 : f32
    %76 = vector.broadcast %cst_29 : f32 to vector<2x4xf32>
    %77 = arith.maximumf %75, %76 : vector<2x4xf32>
    %c0_30 = arith.constant 0 : index
    %c0_31 = arith.constant 0 : index
    %78 = vector.load %arg8[%c0_30, %c0_31] : memref<4x2xf32, #tpu.memory_space<vmem>>, vector<4x2xf32>
    %cst_32 = arith.constant dense<0.000000e+00> : vector<4x4xf32>
    %79 = tpu.matmul %78, %77, %cst_32 {dimension_numbers = #tpu.dot_dimension_numbers<[1], [0], [0], [1], [0, 0, 1, 1], [], []>} : vector<4x2xf32>, vector<2x4xf32>, vector<4x4xf32> -> vector<4x4xf32>
    %80 = vector.extract_strided_slice %79 {offsets = [0, 0], sizes = [4, 2], strides = [1, 1]} : vector<4x4xf32> to vector<4x2xf32>
    %81 = vector.extract_strided_slice %79 {offsets = [0, 2], sizes = [4, 2], strides = [1, 1]} : vector<4x4xf32> to vector<4x2xf32>
    %82 = arith.addf %80, %81 : vector<4x2xf32>
    %83 = arith.negf %82 : vector<4x2xf32>
    %84 = math.exp %83 : vector<4x2xf32>
    %cst_33 = arith.constant 1.000000e+00 : f32
    %85 = vector.broadcast %cst_33 : f32 to vector<4x2xf32>
    %86 = arith.addf %85, %84 : vector<4x2xf32>
    %87 = arith.divf %85, %86 : vector<4x2xf32>
    %cst_34 = arith.constant dense<0.000000e+00> : vector<4x128xf32>
    %88 = tpu.matmul %87, %2, %cst_34 {dimension_numbers = #tpu.dot_dimension_numbers<[1], [0], [0], [1], [0, 0, 1, 1], [], []>} : vector<4x2xf32>, vector<2x128xf32>, vector<4x128xf32> -> vector<4x128xf32>
    %89 = arith.mulf %50, %88 : vector<4x128xf32>
    %cst_35 = arith.constant dense<0.000000e+00> : vector<128xf32>
    %90 = vector.multi_reduction <add>, %89, %cst_35 [0] : vector<4x128xf32> to vector<128xf32>
    %91 = vector.shape_cast %90 : vector<128xf32> to vector<1x128xf32>
    %cst_36 = arith.constant 4.000000e+00 : f32
    %92 = vector.broadcast %cst_36 : f32 to vector<1x128xf32>
    %93 = arith.divf %91, %92 : vector<1x128xf32>
    %cst_37 = arith.constant dense<0xFF800000> : vector<128xf32>
    %94 = vector.multi_reduction <maximumf>, %89, %cst_37 [0] : vector<4x128xf32> to vector<128xf32>
    %95 = vector.shape_cast %94 : vector<128xf32> to vector<1x128xf32>
    %96 = tpu.concatenate %93, %95 in 0 : vector<1x128xf32>, vector<1x128xf32> -> vector<2x128xf32>
    %97 = vector.extract_strided_slice %96 {offsets = [0, 104], sizes = [2, 24], strides = [1, 1]} : vector<2x128xf32> to vector<2x24xf32>
    %98 = vector.extract_strided_slice %96 {offsets = [0, 0], sizes = [2, 104], strides = [1, 1]} : vector<2x128xf32> to vector<2x104xf32>
    %99 = tpu.concatenate %97, %98 in 1 : vector<2x24xf32>, vector<2x104xf32> -> vector<2x128xf32>
    %100 = vector.extract_strided_slice %96 {offsets = [0, 112], sizes = [2, 16], strides = [1, 1]} : vector<2x128xf32> to vector<2x16xf32>
    %101 = vector.extract_strided_slice %96 {offsets = [0, 0], sizes = [2, 112], strides = [1, 1]} : vector<2x128xf32> to vector<2x112xf32>
    %102 = tpu.concatenate %100, %101 in 1 : vector<2x16xf32>, vector<2x112xf32> -> vector<2x128xf32>
    %103 = vector.extract_strided_slice %96 {offsets = [0, 120], sizes = [2, 8], strides = [1, 1]} : vector<2x128xf32> to vector<2x8xf32>
    %104 = vector.extract_strided_slice %96 {offsets = [0, 0], sizes = [2, 120], strides = [1, 1]} : vector<2x128xf32> to vector<2x120xf32>
    %105 = tpu.concatenate %103, %104 in 1 : vector<2x8xf32>, vector<2x120xf32> -> vector<2x128xf32>
    %106 = vector.extract_strided_slice %96 {offsets = [0, 8], sizes = [2, 120], strides = [1, 1]} : vector<2x128xf32> to vector<2x120xf32>
    %107 = vector.extract_strided_slice %96 {offsets = [0, 0], sizes = [2, 8], strides = [1, 1]} : vector<2x128xf32> to vector<2x8xf32>
    %108 = tpu.concatenate %106, %107 in 1 : vector<2x120xf32>, vector<2x8xf32> -> vector<2x128xf32>
    %109 = vector.extract_strided_slice %96 {offsets = [0, 16], sizes = [2, 112], strides = [1, 1]} : vector<2x128xf32> to vector<2x112xf32>
    %110 = vector.extract_strided_slice %96 {offsets = [0, 0], sizes = [2, 16], strides = [1, 1]} : vector<2x128xf32> to vector<2x16xf32>
    %111 = tpu.concatenate %109, %110 in 1 : vector<2x112xf32>, vector<2x16xf32> -> vector<2x128xf32>
    %112 = vector.extract_strided_slice %96 {offsets = [0, 24], sizes = [2, 104], strides = [1, 1]} : vector<2x128xf32> to vector<2x104xf32>
    %113 = vector.extract_strided_slice %96 {offsets = [0, 0], sizes = [2, 24], strides = [1, 1]} : vector<2x128xf32> to vector<2x24xf32>
    %114 = tpu.concatenate %112, %113 in 1 : vector<2x104xf32>, vector<2x24xf32> -> vector<2x128xf32>
    %115 = tpu.concatenate %99, %102, %105, %96, %108, %111, %114 in 0 : vector<2x128xf32>, vector<2x128xf32>, vector<2x128xf32>, vector<2x128xf32>, vector<2x128xf32>, vector<2x128xf32>, vector<2x128xf32> -> vector<14x128xf32>
    %116 = vector.extract_strided_slice %115 {offsets = [0, 125], sizes = [14, 3], strides = [1, 1]} : vector<14x128xf32> to vector<14x3xf32>
    %117 = vector.extract_strided_slice %115 {offsets = [0, 0], sizes = [14, 125], strides = [1, 1]} : vector<14x128xf32> to vector<14x125xf32>
    %118 = tpu.concatenate %116, %117 in 1 : vector<14x3xf32>, vector<14x125xf32> -> vector<14x128xf32>
    %119 = vector.extract_strided_slice %115 {offsets = [0, 126], sizes = [14, 2], strides = [1, 1]} : vector<14x128xf32> to vector<14x2xf32>
    %120 = vector.extract_strided_slice %115 {offsets = [0, 0], sizes = [14, 126], strides = [1, 1]} : vector<14x128xf32> to vector<14x126xf32>
    %121 = tpu.concatenate %119, %120 in 1 : vector<14x2xf32>, vector<14x126xf32> -> vector<14x128xf32>
    %122 = vector.extract_strided_slice %115 {offsets = [0, 127], sizes = [14, 1], strides = [1, 1]} : vector<14x128xf32> to vector<14x1xf32>
    %123 = vector.extract_strided_slice %115 {offsets = [0, 0], sizes = [14, 127], strides = [1, 1]} : vector<14x128xf32> to vector<14x127xf32>
    %124 = tpu.concatenate %122, %123 in 1 : vector<14x1xf32>, vector<14x127xf32> -> vector<14x128xf32>
    %125 = vector.extract_strided_slice %115 {offsets = [0, 1], sizes = [14, 127], strides = [1, 1]} : vector<14x128xf32> to vector<14x127xf32>
    %126 = vector.extract_strided_slice %115 {offsets = [0, 0], sizes = [14, 1], strides = [1, 1]} : vector<14x128xf32> to vector<14x1xf32>
    %127 = tpu.concatenate %125, %126 in 1 : vector<14x127xf32>, vector<14x1xf32> -> vector<14x128xf32>
    %128 = vector.extract_strided_slice %115 {offsets = [0, 2], sizes = [14, 126], strides = [1, 1]} : vector<14x128xf32> to vector<14x126xf32>
    %129 = vector.extract_strided_slice %115 {offsets = [0, 0], sizes = [14, 2], strides = [1, 1]} : vector<14x128xf32> to vector<14x2xf32>
    %130 = tpu.concatenate %128, %129 in 1 : vector<14x126xf32>, vector<14x2xf32> -> vector<14x128xf32>
    %131 = vector.extract_strided_slice %115 {offsets = [0, 3], sizes = [14, 125], strides = [1, 1]} : vector<14x128xf32> to vector<14x125xf32>
    %132 = vector.extract_strided_slice %115 {offsets = [0, 0], sizes = [14, 3], strides = [1, 1]} : vector<14x128xf32> to vector<14x3xf32>
    %133 = tpu.concatenate %131, %132 in 1 : vector<14x125xf32>, vector<14x3xf32> -> vector<14x128xf32>
    %134 = tpu.concatenate %118, %121, %124, %115, %127, %130, %133 in 0 : vector<14x128xf32>, vector<14x128xf32>, vector<14x128xf32>, vector<14x128xf32>, vector<14x128xf32>, vector<14x128xf32>, vector<14x128xf32> -> vector<98x128xf32>
    %c0_38 = arith.constant 0 : index
    %c0_39 = arith.constant 0 : index
    %135 = vector.load %arg2[%c0_38, %c0_39] : memref<98x128xf32, #tpu.memory_space<vmem>>, vector<98x128xf32>
    %136 = arith.mulf %134, %135 : vector<98x128xf32>
    %c0_40 = arith.constant 0 : index
    %c0_41 = arith.constant 0 : index
    %137 = vector.load %arg11[%c0_40, %c0_41] : memref<1x98xf32, #tpu.memory_space<vmem>>, vector<1x98xf32>
    %cst_42 = arith.constant dense<0.000000e+00> : vector<1x128xf32>
    %138 = tpu.matmul %137, %136, %cst_42 {dimension_numbers = #tpu.dot_dimension_numbers<[1], [0], [0], [1], [0, 0, 1, 1], [], []>} : vector<1x98xf32>, vector<98x128xf32>, vector<1x128xf32> -> vector<1x128xf32>
    %c0_43 = arith.constant 0 : index
    %c0_44 = arith.constant 0 : index
    %139 = vector.load %arg12[%c0_43, %c0_44] : memref<1x1xf32, #tpu.memory_space<vmem>>, vector<1x1xf32>
    %140 = vector.broadcast %139 : vector<1x1xf32> to vector<1x128xf32>
    %141 = arith.addf %138, %140 : vector<1x128xf32>
    %142 = arith.negf %141 : vector<1x128xf32>
    %143 = math.exp %142 : vector<1x128xf32>
    %cst_45 = arith.constant 1.000000e+00 : f32
    %144 = vector.broadcast %cst_45 : f32 to vector<1x128xf32>
    %145 = arith.addf %144, %143 : vector<1x128xf32>
    %146 = arith.divf %144, %145 : vector<1x128xf32>
    %147 = vector.broadcast %146 : vector<1x128xf32> to vector<4x128xf32>
    %148 = arith.mulf %89, %147 : vector<4x128xf32>
    %c0_46 = arith.constant 0 : index
    %c0_47 = arith.constant 0 : index
    %149 = vector.load %arg13[%c0_46, %c0_47] : memref<4x1xf32, #tpu.memory_space<vmem>>, vector<4x1xf32>
    %150 = vector.broadcast %149 : vector<4x1xf32> to vector<4x128xf32>
    %151 = arith.mulf %148, %150 : vector<4x128xf32>
    %c0_48 = arith.constant 0 : index
    %c0_49 = arith.constant 0 : index
    %152 = vector.load %arg14[%c0_48, %c0_49] : memref<4x1xf32, #tpu.memory_space<vmem>>, vector<4x1xf32>
    %153 = vector.broadcast %152 : vector<4x1xf32> to vector<4x128xf32>
    %154 = arith.addf %151, %153 : vector<4x128xf32>
    %155 = vector.extract_strided_slice %154 {offsets = [0, 1], sizes = [4, 127], strides = [1, 1]} : vector<4x128xf32> to vector<4x127xf32>
    %156 = vector.extract_strided_slice %154 {offsets = [0, 0], sizes = [4, 1], strides = [1, 1]} : vector<4x128xf32> to vector<4x1xf32>
    %157 = tpu.concatenate %155, %156 in 1 : vector<4x127xf32>, vector<4x1xf32> -> vector<4x128xf32>
    %158 = arith.maximumf %154, %157 : vector<4x128xf32>
    %159 = vector.extract_strided_slice %158 {offsets = [0, 8], sizes = [4, 120], strides = [1, 1]} : vector<4x128xf32> to vector<4x120xf32>
    %160 = vector.extract_strided_slice %158 {offsets = [0, 0], sizes = [4, 8], strides = [1, 1]} : vector<4x128xf32> to vector<4x8xf32>
    %161 = tpu.concatenate %159, %160 in 1 : vector<4x120xf32>, vector<4x8xf32> -> vector<4x128xf32>
    %162 = arith.maximumf %158, %161 : vector<4x128xf32>
    %c0_50 = arith.constant 0 : index
    %c0_51 = arith.constant 0 : index
    %163 = vector.load %arg15[%c0_50, %c0_51] : memref<64x4xf32, #tpu.memory_space<vmem>>, vector<64x4xf32>
    %cst_52 = arith.constant dense<0.000000e+00> : vector<64x128xf32>
    %164 = tpu.matmul %163, %162, %cst_52 {dimension_numbers = #tpu.dot_dimension_numbers<[1], [0], [0], [1], [0, 0, 1, 1], [], []>} : vector<64x4xf32>, vector<4x128xf32>, vector<64x128xf32> -> vector<64x128xf32>
    %c0_53 = arith.constant 0 : index
    %c0_54 = arith.constant 0 : index
    %165 = vector.load %arg16[%c0_53, %c0_54] : memref<64x128xf32, #tpu.memory_space<vmem>>, vector<64x128xf32>
    %166 = arith.mulf %164, %165 : vector<64x128xf32>
    %cst_55 = arith.constant dense<0.000000e+00> : vector<64x2xf32>
    %167 = tpu.matmul %166, %3, %cst_55 {dimension_numbers = #tpu.dot_dimension_numbers<[1], [0], [0], [1], [0, 0, 1, 1], [], []>} : vector<64x128xf32>, vector<128x2xf32>, vector<64x2xf32> -> vector<64x2xf32>
    %c0_56 = arith.constant 0 : index
    %c0_57 = arith.constant 0 : index
    %168 = vector.load %arg17[%c0_56, %c0_57] : memref<10x64xf32, #tpu.memory_space<vmem>>, vector<10x64xf32>
    %cst_58 = arith.constant dense<0.000000e+00> : vector<10x2xf32>
    %169 = tpu.matmul %168, %167, %cst_58 {dimension_numbers = #tpu.dot_dimension_numbers<[1], [0], [0], [1], [0, 0, 1, 1], [], []>} : vector<10x64xf32>, vector<64x2xf32>, vector<10x2xf32> -> vector<10x2xf32>
    %c0_59 = arith.constant 0 : index
    %c0_60 = arith.constant 0 : index
    %170 = vector.load %arg18[%c0_59, %c0_60] : memref<10x1xf32, #tpu.memory_space<vmem>>, vector<10x1xf32>
    %171 = vector.broadcast %170 : vector<10x1xf32> to vector<10x2xf32>
    %172 = arith.addf %169, %171 : vector<10x2xf32>
    %c0_61 = arith.constant 0 : index
    %c0_62 = arith.constant 0 : index
    %173 = vector.load %arg19[%c0_61, %c0_62] : memref<10x2xf32, #tpu.memory_space<vmem>>, vector<10x2xf32>
    tpu.vector_store %arg19[%c0_61, %c0_62], %172 {strides = array<i32>} : memref<10x2xf32, #tpu.memory_space<vmem>>, vector<10x2xf32>,
    return
  }
}

</mosaic_0001>

<llo_original>
// kernel: tpu_custom_call.1
$region0: #{tpu_custom_call.1}
  #allocation0 [shape = 'u32[]', space=smem, size = 0x4, offset = 0x4, fixed_abs, tag = 'smem constant byte address 0x4 - core index']
  #allocation1 [shape = 'u32[144,128]{1,0:T(1,128)}', space=vmem, size = 0x12000, scoped, tag = 'internal scratch']
  #allocation2 [shape = 'f32[1,1]{1,0:T(1,128)S(1)}', space=vmem, size = 0x200, scoped, tag = 'scoped memory for tpu_custom_call.1']
  %s0 = inlined_call_operand.vmem [shape: f32[4,128], index: 0, kind: input, shape index: {}]
  %s1 = inlined_call_operand.vmem [shape: f32[36,128], index: 1, kind: input, shape index: {}]
  %s2 = inlined_call_operand.vmem [shape: f32[98,128], index: 2, kind: input, shape index: {}]
  %s3 = inlined_call_operand.vmem [shape: f32[8,36], index: 3, kind: input, shape index: {}]
  %s4 = inlined_call_operand.vmem [shape: f32[8,1], index: 4, kind: input, shape index: {}]
  %s5 = inlined_call_operand.vmem [shape: f32[4,36], index: 5, kind: input, shape index: {}]
  %s6 = inlined_call_operand.vmem [shape: f32[4,1], index: 6, kind: input, shape index: {}]
  %s7 = inlined_call_operand.vmem [shape: f32[2,4], index: 7, kind: input, shape index: {}]
  %s8 = inlined_call_operand.vmem [shape: f32[4,2], index: 8, kind: input, shape index: {}]
  %s9 = inlined_call_operand.vmem [shape: f32[2,128], index: 9, kind: input, shape index: {}]
  %s10 = inlined_call_operand.vmem [shape: f32[128,2], index: 10, kind: input, shape index: {}]
  %s11 = inlined_call_operand.vmem [shape: f32[1,98], index: 11, kind: input, shape index: {}]
  %s12 = inlined_call_operand.<no memory space> [shape: f32[1,1], index: 12, kind: input, shape index: {}]
  %s13 = inlined_call_operand.vmem [shape: f32[4,1], index: 13, kind: input, shape index: {}]
  %s14 = inlined_call_operand.vmem [shape: f32[4,1], index: 14, kind: input, shape index: {}]
  %s15 = inlined_call_operand.vmem [shape: f32[64,4], index: 15, kind: input, shape index: {}]
  %s16 = inlined_call_operand.vmem [shape: f32[64,128], index: 16, kind: input, shape index: {}]
  %s17 = inlined_call_operand.vmem [shape: f32[10,64], index: 17, kind: input, shape index: {}]
  %s18 = inlined_call_operand.vmem [shape: f32[10,1], index: 18, kind: input, shape index: {}]
  %s19 = inlined_call_operand.vmem [shape: f32[10,2], index: 19, kind: output, shape index: {}]
  %s20 = sld [smem:[#allocation0]]
  $region86: #{tpu_custom_call.1} parent=0
    _
  %s22 = ssub.s32 1, %s20
  %s23 = scalar_select 0, %s22, %s20
  %v24 = vstv %s12
  %25 = vst [vmem:[#allocation2] sm:$0x1] %v24
  // Predicated region
  $region2: #{tpu_custom_call.1} parent=0 // pred_check
    _
  $region3: #{tpu_custom_call.1} parent=0 // pred_check_branch
    %27 = sbr.rel (0) target = $region5
  $region4: #{tpu_custom_call.1} parent=0 // pred_region
    _
  $region5: #{tpu_custom_call.1} parent=0 // pred_fallthru
    _
  // Predicated region
  $region6: #{tpu_custom_call.1} parent=0 // pred_check
    _
  $region7: #{tpu_custom_call.1} parent=0 // pred_check_branch
    %29 = sbr.rel (0) target = $region9
  $region8: #{tpu_custom_call.1} parent=0 // pred_region
    _
  $region9: #{tpu_custom_call.1} parent=0 // pred_fallthru
    _
  // Predicated region
  $region10: #{tpu_custom_call.1} parent=0 // pred_check
    _
  $region11: #{tpu_custom_call.1} parent=0 // pred_check_branch
    %31 = sbr.rel (0) target = $region13
  $region12: #{tpu_custom_call.1} parent=0 // pred_region
    _
  $region13: #{tpu_custom_call.1} parent=0 // pred_fallthru
    _
  // Predicated region
  $region14: #{tpu_custom_call.1} parent=0 // pred_check
    _
  $region15: #{tpu_custom_call.1} parent=0 // pred_check_branch
    %33 = sbr.rel (0) target = $region17
  $region16: #{tpu_custom_call.1} parent=0 // pred_region
    _
  $region17: #{tpu_custom_call.1} parent=0 // pred_fallthru
    _
  // Predicated region
  $region18: #{tpu_custom_call.1} parent=0 // pred_check
    _
  $region19: #{tpu_custom_call.1} parent=0 // pred_check_branch
    %35 = sbr.rel (0) target = $region21
  $region20: #{tpu_custom_call.1} parent=0 // pred_region
    _
  $region21: #{tpu_custom_call.1} parent=0 // pred_fallthru
    _
  // Predicated region
  $region22: #{tpu_custom_call.1} parent=0 // pred_check
    _
  $region23: #{tpu_custom_call.1} parent=0 // pred_check_branch
    %37 = sbr.rel (0) target = $region25
  $region24: #{tpu_custom_call.1} parent=0 // pred_region
    _
  $region25: #{tpu_custom_call.1} parent=0 // pred_fallthru
    _
  // Predicated region
  $region26: #{tpu_custom_call.1} parent=0 // pred_check
    _
  $region27: #{tpu_custom_call.1} parent=0 // pred_check_branch
    %39 = sbr.rel (0) target = $region29
  $region28: #{tpu_custom_call.1} parent=0 // pred_region
    _
  $region29: #{tpu_custom_call.1} parent=0 // pred_fallthru
    _
  // Predicated region
  $region30: #{tpu_custom_call.1} parent=0 // pred_check
    _
  $region31: #{tpu_custom_call.1} parent=0 // pred_check_branch
    %41 = sbr.rel (0) target = $region33
  $region32: #{tpu_custom_call.1} parent=0 // pred_region
    _
  $region33: #{tpu_custom_call.1} parent=0 // pred_fallthru
    _
  // Predicated region
  $region34: #{tpu_custom_call.1} parent=0 // pred_check
    _
  $region35: #{tpu_custom_call.1} parent=0 // pred_check_branch
    %43 = sbr.rel (0) target = $region37
  $region36: #{tpu_custom_call.1} parent=0 // pred_region
    _
  $region37: #{tpu_custom_call.1} parent=0 // pred_fallthru
    _
  // Predicated region
  $region38: #{tpu_custom_call.1} parent=0 // pred_check
    _
  $region39: #{tpu_custom_call.1} parent=0 // pred_check_branch
    %45 = sbr.rel (0) target = $region41
  $region40: #{tpu_custom_call.1} parent=0 // pred_region
    _
  $region41: #{tpu_custom_call.1} parent=0 // pred_fallthru
    _
  // Predicated region
  $region42: #{tpu_custom_call.1} parent=0 // pred_check
    _
  $region43: #{tpu_custom_call.1} parent=0 // pred_check_branch
    %47 = sbr.rel (0) target = $region45
  $region44: #{tpu_custom_call.1} parent=0 // pred_region
    _
  $region45: #{tpu_custom_call.1} parent=0 // pred_fallthru
    _
  // Predicated region
  $region46: #{tpu_custom_call.1} parent=0 // pred_check
    _
  $region47: #{tpu_custom_call.1} parent=0 // pred_check_branch
    %49 = sbr.rel (0) target = $region49
  $region48: #{tpu_custom_call.1} parent=0 // pred_region
    _
  $region49: #{tpu_custom_call.1} parent=0 // pred_fallthru
    _
  // Predicated region
  $region50: #{tpu_custom_call.1} parent=0 // pred_check
    _
  $region51: #{tpu_custom_call.1} parent=0 // pred_check_branch
    %51 = sbr.rel (0) target = $region53
  $region52: #{tpu_custom_call.1} parent=0 // pred_region
    _
  $region53: #{tpu_custom_call.1} parent=0 // pred_fallthru
    _
  // Predicated region
  $region54: #{tpu_custom_call.1} parent=0 // pred_check
    _
  $region55: #{tpu_custom_call.1} parent=0 // pred_check_branch
    %53 = sbr.rel (0) target = $region57
  $region56: #{tpu_custom_call.1} parent=0 // pred_region
    _
  $region57: #{tpu_custom_call.1} parent=0 // pred_fallthru
    _
  // Predicated region
  $region58: #{tpu_custom_call.1} parent=0 // pred_check
    _
  $region59: #{tpu_custom_call.1} parent=0 // pred_check_branch
    %55 = sbr.rel (0) target = $region61
  $region60: #{tpu_custom_call.1} parent=0 // pred_region
    _
  $region61: #{tpu_custom_call.1} parent=0 // pred_fallthru
    _
  // Predicated region
  $region62: #{tpu_custom_call.1} parent=0 // pred_check
    _
  $region63: #{tpu_custom_call.1} parent=0 // pred_check_branch
    %57 = sbr.rel (0) target = $region65
  $region64: #{tpu_custom_call.1} parent=0 // pred_region
    _
  $region65: #{tpu_custom_call.1} parent=0 // pred_fallthru
    _
  // Predicated region
  $region66: #{tpu_custom_call.1} parent=0 // pred_check
    _
  $region67: #{tpu_custom_call.1} parent=0 // pred_check_branch
    %59 = sbr.rel (0) target = $region69
  $region68: #{tpu_custom_call.1} parent=0 // pred_region
    _
  $region69: #{tpu_custom_call.1} parent=0 // pred_fallthru
    _
  // Predicated region
  $region70: #{tpu_custom_call.1} parent=0 // pred_check
    _
  $region71: #{tpu_custom_call.1} parent=0 // pred_check_branch
    %61 = sbr.rel (0) target = $region73
  $region72: #{tpu_custom_call.1} parent=0 // pred_region
    _
  $region73: #{tpu_custom_call.1} parent=0 // pred_fallthru
    _
  // Predicated region
  $region74: #{tpu_custom_call.1} parent=0 // pred_check
    _
  $region75: #{tpu_custom_call.1} parent=0 // pred_check_branch
    %63 = sbr.rel (0) target = $region77
  $region76: #{tpu_custom_call.1} parent=0 // pred_region
    _
  $region77: #{tpu_custom_call.1} parent=0 // pred_fallthru
    _
  %v64 = vld [vmem:[%s0] sm:$0xf]
  %v65 = vld [vmem:[%s1] sm:$0xff]
  %v66 = vld [vmem:[%s1 + $0x8] sm:$0xff]
  %v67 = vld [vmem:[%s1 + $0x10] sm:$0xff]
  %v68 = vld [vmem:[%s1 + $0x18] sm:$0xff]
  %v69 = vld [vmem:[%s1 + $0x20] sm:$0xf]
  %v70 = vld [vmem:[%s9] sm:$0x3]
  %v71 = vld [vmem:[%s10] sm:$0xff]
  %v72 = vld [vmem:[%s10 + $0x8] sm:$0xff]
  %v73 = vld [vmem:[%s10 + $0x10] sm:$0xff]
  %v74 = vld [vmem:[%s10 + $0x18] sm:$0xff]
  %v75 = vld [vmem:[%s10 + $0x20] sm:$0xff]
  %v76 = vld [vmem:[%s10 + $0x28] sm:$0xff]
  %v77 = vld [vmem:[%s10 + $0x30] sm:$0xff]
  %v78 = vld [vmem:[%s10 + $0x38] sm:$0xff]
  %v79 = vld [vmem:[%s10 + $0x40] sm:$0xff]
  %v80 = vld [vmem:[%s10 + $0x48] sm:$0xff]
  %v81 = vld [vmem:[%s10 + $0x50] sm:$0xff]
  %v82 = vld [vmem:[%s10 + $0x58] sm:$0xff]
  %v83 = vld [vmem:[%s10 + $0x60] sm:$0xff]
  %v84 = vld [vmem:[%s10 + $0x68] sm:$0xff]
  %v85 = vld [vmem:[%s10 + $0x70] sm:$0xff]
  %v86 = vld [vmem:[%s10 + $0x78] sm:$0xff]
  %88 = vrot.lane.b32.xlu0 %v64, 8
  %v89 = vpop.permute.xlu0 %88
  %91 = vrot.lane.b32.xlu0 %v64, 120
  %v92 = vpop.permute.xlu0 %91
  %v94 = vrot.slane %v64, 4
  %vm96 = vcmask 1043456
  %v97 = vsel %vm96, %v89, %v94
  %100 = vrot.lane.b32.xlu0 %v97, 1
  %v101 = vpop.permute.xlu0 %100
  %102 = vrot.lane.b32.xlu0 %v92, 1
  %v103 = vpop.permute.xlu0 %102
  %vm106 = vcmask 7168
  %107 = vrot.lane.b32.xlu0 %v97, 127
  %v108 = vpop.permute.xlu0 %107
  %109 = vrot.lane.b32.xlu0 %v92, 127
  %v110 = vpop.permute.xlu0 %109
  %v113 = vrot.slane %v97, 4
  %v114 = vrot.slane %v92, 4
  %v115 = vsel %vm96, %v113, %v114
  %v118 = vsel %vm96, %v103, %v113
  %v119 = vmul.f32 %v101, %v65
  %v120 = vmul.f32 %v118, %v66
  %v121 = vmul.f32 %v115, %v67
  %v122 = vmul.f32 %v108, %v68
  %v123 = vmul.f32 %v110, %v69
  %v124 = vld [vmem:[%s3] sm:$0xff]
  %v125 = vld [vmem:[%s4] sm:$0xff]
  %127 = vset.pattern.permute.xlu0 0
  %128 = vperm.xlu0 %127, %v125
  %v129 = vpop.permute.xlu0 %128
  %vm131 = vcmask 293888
  %v133 = vsel %vm131, %v124, 0
  %v136 = vsel %vm96, %v123, 0
  %138 = vmatprep.subr.mxu0 0.0
  %139 = vmatpush1.msra.mxu0 0.0
  %140 = vmatprep.subr.mxu0 0.0
  %141 = vmatpush1.msra.mxu0 0.0
  %142 = vmatprep.subr.mxu0 0.0
  %143 = vmatpush1.msra.mxu0 0.0
  %144 = vmatprep.subr.mxu0 0.0
  %145 = vmatpush1.msra.mxu0 0.0
  %146 = vmatprep.subr.mxu0 0.0
  %147 = vmatpush1.msra.mxu0 0.0
  %148 = vmatprep.subr.mxu0 0.0
  %149 = vmatpush1.msra.mxu0 0.0
  %150 = vmatprep.subr.mxu0 0.0
  %151 = vmatpush1.msra.mxu0 0.0
  %152 = vmatprep.subr.mxu0 0.0
  %153 = vmatpush1.msra.mxu0 0.0
  %154 = vmatprep.subr.mxu0 0.0
  %155 = vmatpush1.msra.mxu0 0.0
  %156 = vmatprep.subr.mxu0 0.0
  %157 = vmatpush1.msra.mxu0 0.0
  %158 = vmatprep.subr.mxu0 0.0
  %159 = vmatpush1.msra.mxu0 0.0
  %160 = vmatprep.subr.mxu0 0.0
  %161 = vmatpush1.msra.mxu0 %v136
  %162 = vmatprep.subr.mxu0 0.0
  %163 = vmatpush1.msra.mxu0 %v122
  %164 = vmatprep.subr.mxu0 0.0
  %165 = vmatpush1.msra.mxu0 %v121
  %166 = vmatprep.subr.mxu0 0.0
  %167 = vmatpush1.msra.mxu0 %v120
  %168 = vmatprep.subr.mxu0 0.0
  %169 = vmatpush1.msra.mxu0 %v119
  %170 = vmatprep.subr.mxu0 0.0
  %171 = vmatpush2.msra.mxu0 0.0
  %172 = vmatprep.subr.mxu0 0.0
  %173 = vmatpush2.msra.mxu0 0.0
  %174 = vmatprep.subr.mxu0 0.0
  %175 = vmatpush2.msra.mxu0 0.0
  %176 = vmatprep.subr.mxu0 0.0
  %177 = vmatpush2.msra.mxu0 0.0
  %178 = vmatprep.subr.mxu0 0.0
  %179 = vmatpush2.msra.mxu0 0.0
  %180 = vmatprep.subr.mxu0 0.0
  %181 = vmatpush2.msra.mxu0 0.0
  %182 = vmatprep.subr.mxu0 0.0
  %183 = vmatpush2.msra.mxu0 0.0
  %184 = vmatprep.subr.mxu0 0.0
  %185 = vmatpush2.msra.mxu0 0.0
  %186 = vmatprep.subr.mxu0 0.0
  %187 = vmatpush2.msra.mxu0 0.0
  %188 = vmatprep.subr.mxu0 0.0
  %189 = vmatpush2.msra.mxu0 0.0
  %190 = vmatprep.subr.mxu0 0.0
  %191 = vmatpush2.msra.mxu0 0.0
  %192 = vmatprep.subr.mxu0 0.0
  %193 = vmatpush2.msra.mxu0 0.0
  %194 = vmatprep.subr.mxu0 0.0
  %195 = vmatpush2.msra.mxu0 0.0
  %196 = vmatprep.subr.mxu0 0.0
  %197 = vmatpush2.msra.mxu0 0.0
  %198 = vmatprep.subr.mxu0 0.0
  %199 = vmatpush2.msra.mxu0 0.0
  %200 = vmatprep.subr.mxu0 0.0
  %201 = vmatpush2.msra.mxu0 0.0
  %202 = vmatprep.mubr.f32.mxu0 0.0
  %203 = vmatmul.mubr.f32.gmra.mxu0 %v133
  %v204 = vpop.f32.mrf.mxu0
  %v205 = vadd.f32 %v129, %v204
  %v206 = vpop.f32.mrf.mxu0
  %207 = vdwg.mxu0
  %v208 = vmax.f32 %v205, 0.0
  %210 = vrot.lane.b32.xlu0 %v208, 8
  %v211 = vpop.permute.xlu0 %210
  %213 = vrot.lane.b32.xlu0 %v208, 120
  %v214 = vpop.permute.xlu0 %213
  %v216 = vrot.slane %v208, 4
  %v218 = vsel %vm96, %v211, %v216
  %221 = vrot.lane.b32.xlu0 %v218, 1
  %v222 = vpop.permute.xlu0 %221
  %223 = vrot.lane.b32.xlu0 %v214, 1
  %v224 = vpop.permute.xlu0 %223
  %227 = vrot.lane.b32.xlu0 %v218, 127
  %v228 = vpop.permute.xlu0 %227
  %229 = vrot.lane.b32.xlu0 %v214, 127
  %v230 = vpop.permute.xlu0 %229
  %v233 = vrot.slane %v218, 4
  %v234 = vrot.slane %v214, 4
  %v235 = vsel %vm96, %v233, %v234
  %v238 = vsel %vm96, %v224, %v233
  %v239 = vmul.f32 %v222, %v65
  %v240 = vmul.f32 %v238, %v66
  %v241 = vmul.f32 %v235, %v67
  %v242 = vmul.f32 %v228, %v68
  %v243 = vmul.f32 %v230, %v69
  %v244 = vld [vmem:[%s5] sm:$0xf]
  %v245 = vld [vmem:[%s6] sm:$0xf]
  %247 = vset.pattern.permute.xlu0 0
  %248 = vperm.xlu0 %247, %v245
  %v249 = vpop.permute.xlu0 %248
  %v252 = vsel %vm131, %v244, 0
  %v255 = vsel %vm96, %v243, 0
  %257 = vmatprep.subr.mxu0 0.0
  %258 = vmatpush1.msra.mxu0 0.0
  %259 = vmatprep.subr.mxu0 0.0
  %260 = vmatpush1.msra.mxu0 0.0
  %261 = vmatprep.subr.mxu0 0.0
  %262 = vmatpush1.msra.mxu0 0.0
  %263 = vmatprep.subr.mxu0 0.0
  %264 = vmatpush1.msra.mxu0 0.0
  %265 = vmatprep.subr.mxu0 0.0
  %266 = vmatpush1.msra.mxu0 0.0
  %267 = vmatprep.subr.mxu0 0.0
  %268 = vmatpush1.msra.mxu0 0.0
  %269 = vmatprep.subr.mxu0 0.0
  %270 = vmatpush1.msra.mxu0 0.0
  %271 = vmatprep.subr.mxu0 0.0
  %272 = vmatpush1.msra.mxu0 0.0
  %273 = vmatprep.subr.mxu0 0.0
  %274 = vmatpush1.msra.mxu0 0.0
  %275 = vmatprep.subr.mxu0 0.0
  %276 = vmatpush1.msra.mxu0 0.0
  %277 = vmatprep.subr.mxu0 0.0
  %278 = vmatpush1.msra.mxu0 0.0
  %279 = vmatprep.subr.mxu0 0.0
  %280 = vmatpush1.msra.mxu0 %v255
  %281 = vmatprep.subr.mxu0 0.0
  %282 = vmatpush1.msra.mxu0 %v242
  %283 = vmatprep.subr.mxu0 0.0
  %284 = vmatpush1.msra.mxu0 %v241
  %285 = vmatprep.subr.mxu0 0.0
  %286 = vmatpush1.msra.mxu0 %v240
  %287 = vmatprep.subr.mxu0 0.0
  %288 = vmatpush1.msra.mxu0 %v239
  %289 = vmatprep.subr.mxu0 0.0
  %290 = vmatpush2.msra.mxu0 0.0
  %291 = vmatprep.subr.mxu0 0.0
  %292 = vmatpush2.msra.mxu0 0.0
  %293 = vmatprep.subr.mxu0 0.0
  %294 = vmatpush2.msra.mxu0 0.0
  %295 = vmatprep.subr.mxu0 0.0
  %296 = vmatpush2.msra.mxu0 0.0
  %297 = vmatprep.subr.mxu0 0.0
  %298 = vmatpush2.msra.mxu0 0.0
  %299 = vmatprep.subr.mxu0 0.0
  %300 = vmatpush2.msra.mxu0 0.0
  %301 = vmatprep.subr.mxu0 0.0
  %302 = vmatpush2.msra.mxu0 0.0
  %303 = vmatprep.subr.mxu0 0.0
  %304 = vmatpush2.msra.mxu0 0.0
  %305 = vmatprep.subr.mxu0 0.0
  %306 = vmatpush2.msra.mxu0 0.0
  %307 = vmatprep.subr.mxu0 0.0
  %308 = vmatpush2.msra.mxu0 0.0
  %309 = vmatprep.subr.mxu0 0.0
  %310 = vmatpush2.msra.mxu0 0.0
  %311 = vmatprep.subr.mxu0 0.0
  %312 = vmatpush2.msra.mxu0 0.0
  %313 = vmatprep.subr.mxu0 0.0
  %314 = vmatpush2.msra.mxu0 0.0
  %315 = vmatprep.subr.mxu0 0.0
  %316 = vmatpush2.msra.mxu0 0.0
  %317 = vmatprep.subr.mxu0 0.0
  %318 = vmatpush2.msra.mxu0 0.0
  %319 = vmatprep.subr.mxu0 0.0
  %320 = vmatpush2.msra.mxu0 0.0
  %321 = vmatprep.mubr.f32.mxu0 0.0
  %322 = vmatmul.mubr.f32.gmra.mxu0 %v252
  %v323 = vpop.f32.mrf.mxu0
  %v324 = vadd.f32 %v249, %v323
  %v325 = vpop.f32.mrf.mxu0
  %326 = vdwg.mxu0
  %v327 = vmax.f32 %v324, 0.0
  %v328 = vadd.f32 %v327, %v216
  %329 = vmatprep.subr.mxu0 0.0
  %330 = vmatpush1.msra.mxu0 %v86
  %331 = vmatprep.subr.mxu0 0.0
  %332 = vmatpush1.msra.mxu0 %v85
  %333 = vmatprep.subr.mxu0 0.0
  %334 = vmatpush1.msra.mxu0 %v84
  %335 = vmatprep.subr.mxu0 0.0
  %336 = vmatpush1.msra.mxu0 %v83
  %337 = vmatprep.subr.mxu0 0.0
  %338 = vmatpush1.msra.mxu0 %v82
  %339 = vmatprep.subr.mxu0 0.0
  %340 = vmatpush1.msra.mxu0 %v81
  %341 = vmatprep.subr.mxu0 0.0
  %342 = vmatpush1.msra.mxu0 %v80
  %343 = vmatprep.subr.mxu0 0.0
  %344 = vmatpush1.msra.mxu0 %v79
  %345 = vmatprep.subr.mxu0 0.0
  %346 = vmatpush1.msra.mxu0 %v78
  %347 = vmatprep.subr.mxu0 0.0
  %348 = vmatpush1.msra.mxu0 %v77
  %349 = vmatprep.subr.mxu0 0.0
  %350 = vmatpush1.msra.mxu0 %v76
  %351 = vmatprep.subr.mxu0 0.0
  %352 = vmatpush1.msra.mxu0 %v75
  %353 = vmatprep.subr.mxu0 0.0
  %354 = vmatpush1.msra.mxu0 %v74
  %355 = vmatprep.subr.mxu0 0.0
  %356 = vmatpush1.msra.mxu0 %v73
  %357 = vmatprep.subr.mxu0 0.0
  %358 = vmatpush1.msra.mxu0 %v72
  %359 = vmatprep.subr.mxu0 0.0
  %360 = vmatpush1.msra.mxu0 %v71
  %361 = vmatprep.subr.mxu0 0.0
  %362 = vmatpush2.msra.mxu0 0.0
  %363 = vmatprep.subr.mxu0 0.0
  %364 = vmatpush2.msra.mxu0 0.0
  %365 = vmatprep.subr.mxu0 0.0
  %366 = vmatpush2.msra.mxu0 0.0
  %367 = vmatprep.subr.mxu0 0.0
  %368 = vmatpush2.msra.mxu0 0.0
  %369 = vmatprep.subr.mxu0 0.0
  %370 = vmatpush2.msra.mxu0 0.0
  %371 = vmatprep.subr.mxu0 0.0
  %372 = vmatpush2.msra.mxu0 0.0
  %373 = vmatprep.subr.mxu0 0.0
  %374 = vmatpush2.msra.mxu0 0.0
  %375 = vmatprep.subr.mxu0 0.0
  %376 = vmatpush2.msra.mxu0 0.0
  %377 = vmatprep.subr.mxu0 0.0
  %378 = vmatpush2.msra.mxu0 0.0
  %379 = vmatprep.subr.mxu0 0.0
  %380 = vmatpush2.msra.mxu0 0.0
  %381 = vmatprep.subr.mxu0 0.0
  %382 = vmatpush2.msra.mxu0 0.0
  %383 = vmatprep.subr.mxu0 0.0
  %384 = vmatpush2.msra.mxu0 0.0
  %385 = vmatprep.subr.mxu0 0.0
  %386 = vmatpush2.msra.mxu0 0.0
  %387 = vmatprep.subr.mxu0 0.0
  %388 = vmatpush2.msra.mxu0 0.0
  %389 = vmatprep.subr.mxu0 0.0
  %390 = vmatpush2.msra.mxu0 0.0
  %391 = vmatprep.subr.mxu0 0.0
  %392 = vmatpush2.msra.mxu0 0.0
  %393 = vmatprep.mubr.f32.mxu0 0.0
  %394 = vmatmul.mubr.f32.gmra.mxu0 %v328
  %v395 = vpop.f32.mrf.mxu0
  %v396 = vadd.f32 0.0, %v395
  %v397 = vpop.f32.mrf.mxu0
  %398 = vdwg.mxu0
  %v399 = vmul.f32 %v396, 0.015625
  %vm400 = vcmp.gt.f32.partialorder %v70, 0.5
  %v401 = vsel %vm400, 1, 0
  %v402 = vlaneseq
  %v403 = vshrl.u32 %v402, 7
  %v404 = vsub.s32 0, %v403
  %v405 = vrot.slane %v401, %v404
  %vm406 = vcmp.eq.s32.totalorder %v405, 1
  %v407 = vsel %vm406, %v328, -1e+30
  %v408 = vsel %vm96, %v407, -inf
  %409 = vmax.xlane.f32.xlu0 %v408
  %v410 = vpop.xlane.xlu0 %409
  %v411 = vlaneseq
  %v412 = vshrl.u32 %v411, 7
  %v413 = vsub.s32 1, %v412
  %v414 = vrot.slane %v401, %v413
  %vm415 = vcmp.eq.s32.totalorder %v414, 1
  %v416 = vsel %vm415, %v328, -1e+30
  %v417 = vsel %vm96, %v416, -inf
  %418 = vmax.xlane.f32.xlu0 %v417
  %v419 = vpop.xlane.xlu0 %418
  %v420 = vsel %vm106, %v410, %v419
  %422 = vrot.lane.b32.xlu0 %v420, 2
  %v423 = vpop.permute.xlu0 %422
  %vm425 = vcmask 15360
  %v426 = vsel %vm425, %v399, %v423
  %v427 = vld [vmem:[%s7] sm:$0x3]
  %vm428 = vcmask 31744
  %v430 = vsel %vm428, %v427, 0
  %v433 = vsel %vm96, %v426, 0
  %435 = vmatprep.subr.mxu0 0.0
  %436 = vmatpush1.msra.mxu0 0.0
  %437 = vmatprep.subr.mxu0 0.0
  %438 = vmatpush1.msra.mxu0 0.0
  %439 = vmatprep.subr.mxu0 0.0
  %440 = vmatpush1.msra.mxu0 0.0
  %441 = vmatprep.subr.mxu0 0.0
  %442 = vmatpush1.msra.mxu0 0.0
  %443 = vmatprep.subr.mxu0 0.0
  %444 = vmatpush1.msra.mxu0 0.0
  %445 = vmatprep.subr.mxu0 0.0
  %446 = vmatpush1.msra.mxu0 0.0
  %447 = vmatprep.subr.mxu0 0.0
  %448 = vmatpush1.msra.mxu0 0.0
  %449 = vmatprep.subr.mxu0 0.0
  %450 = vmatpush1.msra.mxu0 0.0
  %451 = vmatprep.subr.mxu0 0.0
  %452 = vmatpush1.msra.mxu0 0.0
  %453 = vmatprep.subr.mxu0 0.0
  %454 = vmatpush1.msra.mxu0 0.0
  %455 = vmatprep.subr.mxu0 0.0
  %456 = vmatpush1.msra.mxu0 0.0
  %457 = vmatprep.subr.mxu0 0.0
  %458 = vmatpush1.msra.mxu0 0.0
  %459 = vmatprep.subr.mxu0 0.0
  %460 = vmatpush1.msra.mxu0 0.0
  %461 = vmatprep.subr.mxu0 0.0
  %462 = vmatpush1.msra.mxu0 0.0
  %463 = vmatprep.subr.mxu0 0.0
  %464 = vmatpush1.msra.mxu0 0.0
  %465 = vmatprep.subr.mxu0 0.0
  %466 = vmatpush1.msra.mxu0 %v433
  %467 = vmatprep.subr.mxu0 0.0
  %468 = vmatpush2.msra.mxu0 0.0
  %469 = vmatprep.subr.mxu0 0.0
  %470 = vmatpush2.msra.mxu0 0.0
  %471 = vmatprep.subr.mxu0 0.0
  %472 = vmatpush2.msra.mxu0 0.0
  %473 = vmatprep.subr.mxu0 0.0
  %474 = vmatpush2.msra.mxu0 0.0
  %475 = vmatprep.subr.mxu0 0.0
  %476 = vmatpush2.msra.mxu0 0.0
  %477 = vmatprep.subr.mxu0 0.0
  %478 = vmatpush2.msra.mxu0 0.0
  %479 = vmatprep.subr.mxu0 0.0
  %480 = vmatpush2.msra.mxu0 0.0
  %481 = vmatprep.subr.mxu0 0.0
  %482 = vmatpush2.msra.mxu0 0.0
  %483 = vmatprep.subr.mxu0 0.0
  %484 = vmatpush2.msra.mxu0 0.0
  %485 = vmatprep.subr.mxu0 0.0
  %486 = vmatpush2.msra.mxu0 0.0
  %487 = vmatprep.subr.mxu0 0.0
  %488 = vmatpush2.msra.mxu0 0.0
  %489 = vmatprep.subr.mxu0 0.0
  %490 = vmatpush2.msra.mxu0 0.0
  %491 = vmatprep.subr.mxu0 0.0
  %492 = vmatpush2.msra.mxu0 0.0
  %493 = vmatprep.subr.mxu0 0.0
  %494 = vmatpush2.msra.mxu0 0.0
  %495 = vmatprep.subr.mxu0 0.0
  %496 = vmatpush2.msra.mxu0 0.0
  %497 = vmatprep.subr.mxu0 0.0
  %498 = vmatpush2.msra.mxu0 0.0
  %499 = vmatprep.mubr.f32.mxu0 0.0
  %500 = vmatmul.mubr.f32.gmra.mxu0 %v430
  %v501 = vpop.f32.mrf.mxu0
  %v502 = vadd.f32 0.0, %v501
  %v503 = vpop.f32.mrf.mxu0
  %504 = vdwg.mxu0
  %v505 = vmax.f32 %v502, 0.0
  %v506 = vld [vmem:[%s8] sm:$0xf]
  %v508 = vsel %vm425, %v506, 0
  %vm510 = vcmask 1041408
  %v512 = vsel %vm510, %v505, 0
  %514 = vmatprep.subr.mxu0 0.0
  %515 = vmatpush1.msra.mxu0 0.0
  %516 = vmatprep.subr.mxu0 0.0
  %517 = vmatpush1.msra.mxu0 0.0
  %518 = vmatprep.subr.mxu0 0.0
  %519 = vmatpush1.msra.mxu0 0.0
  %520 = vmatprep.subr.mxu0 0.0
  %521 = vmatpush1.msra.mxu0 0.0
  %522 = vmatprep.subr.mxu0 0.0
  %523 = vmatpush1.msra.mxu0 0.0
  %524 = vmatprep.subr.mxu0 0.0
  %525 = vmatpush1.msra.mxu0 0.0
  %526 = vmatprep.subr.mxu0 0.0
  %527 = vmatpush1.msra.mxu0 0.0
  %528 = vmatprep.subr.mxu0 0.0
  %529 = vmatpush1.msra.mxu0 0.0
  %530 = vmatprep.subr.mxu0 0.0
  %531 = vmatpush1.msra.mxu0 0.0
  %532 = vmatprep.subr.mxu0 0.0
  %533 = vmatpush1.msra.mxu0 0.0
  %534 = vmatprep.subr.mxu0 0.0
  %535 = vmatpush1.msra.mxu0 0.0
  %536 = vmatprep.subr.mxu0 0.0
  %537 = vmatpush1.msra.mxu0 0.0
  %538 = vmatprep.subr.mxu0 0.0
  %539 = vmatpush1.msra.mxu0 0.0
  %540 = vmatprep.subr.mxu0 0.0
  %541 = vmatpush1.msra.mxu0 0.0
  %542 = vmatprep.subr.mxu0 0.0
  %543 = vmatpush1.msra.mxu0 0.0
  %544 = vmatprep.subr.mxu0 0.0
  %545 = vmatpush1.msra.mxu0 %v512
  %546 = vmatprep.subr.mxu0 0.0
  %547 = vmatpush2.msra.mxu0 0.0
  %548 = vmatprep.subr.mxu0 0.0
  %549 = vmatpush2.msra.mxu0 0.0
  %550 = vmatprep.subr.mxu0 0.0
  %551 = vmatpush2.msra.mxu0 0.0
  %552 = vmatprep.subr.mxu0 0.0
  %553 = vmatpush2.msra.mxu0 0.0
  %554 = vmatprep.subr.mxu0 0.0
  %555 = vmatpush2.msra.mxu0 0.0
  %556 = vmatprep.subr.mxu0 0.0
  %557 = vmatpush2.msra.mxu0 0.0
  %558 = vmatprep.subr.mxu0 0.0
  %559 = vmatpush2.msra.mxu0 0.0
  %560 = vmatprep.subr.mxu0 0.0
  %561 = vmatpush2.msra.mxu0 0.0
  %562 = vmatprep.subr.mxu0 0.0
  %563 = vmatpush2.msra.mxu0 0.0
  %564 = vmatprep.subr.mxu0 0.0
  %565 = vmatpush2.msra.mxu0 0.0
  %566 = vmatprep.subr.mxu0 0.0
  %567 = vmatpush2.msra.mxu0 0.0
  %568 = vmatprep.subr.mxu0 0.0
  %569 = vmatpush2.msra.mxu0 0.0
  %570 = vmatprep.subr.mxu0 0.0
  %571 = vmatpush2.msra.mxu0 0.0
  %572 = vmatprep.subr.mxu0 0.0
  %573 = vmatpush2.msra.mxu0 0.0
  %574 = vmatprep.subr.mxu0 0.0
  %575 = vmatpush2.msra.mxu0 0.0
  %576 = vmatprep.subr.mxu0 0.0
  %577 = vmatpush2.msra.mxu0 0.0
  %578 = vmatprep.mubr.f32.mxu0 0.0
  %579 = vmatmul.mubr.f32.gmra.mxu0 %v508
  %v580 = vpop.f32.mrf.mxu0
  %v581 = vadd.f32 0.0, %v580
  %v582 = vpop.f32.mrf.mxu0
  %583 = vdwg.mxu0
  %585 = vrot.lane.b32.xlu0 %v581, 126
  %v586 = vpop.permute.xlu0 %585
  %v588 = vadd.f32 %v581, %v586
  %v589 = vxor.u32 %v588, 2147483648
  %v590 = vmul.f32 %v589, 1.442695
  %v591 = vpow.pop %v590
  %v592 = vadd.f32 %v591, 1.0
  %v593 = vrcp.pop %v592
  %v594 = vmul.f32 1.0, %v593
  %v596 = vsel %vm425, %v594, 0
  %v599 = vsel %vm510, %v70, 0
  %601 = vmatprep.subr.mxu0 0.0
  %602 = vmatpush1.msra.mxu0 0.0
  %603 = vmatprep.subr.mxu0 0.0
  %604 = vmatpush1.msra.mxu0 0.0
  %605 = vmatprep.subr.mxu0 0.0
  %606 = vmatpush1.msra.mxu0 0.0
  %607 = vmatprep.subr.mxu0 0.0
  %608 = vmatpush1.msra.mxu0 0.0
  %609 = vmatprep.subr.mxu0 0.0
  %610 = vmatpush1.msra.mxu0 0.0
  %611 = vmatprep.subr.mxu0 0.0
  %612 = vmatpush1.msra.mxu0 0.0
  %613 = vmatprep.subr.mxu0 0.0
  %614 = vmatpush1.msra.mxu0 0.0
  %615 = vmatprep.subr.mxu0 0.0
  %616 = vmatpush1.msra.mxu0 0.0
  %617 = vmatprep.subr.mxu0 0.0
  %618 = vmatpush1.msra.mxu0 0.0
  %619 = vmatprep.subr.mxu0 0.0
  %620 = vmatpush1.msra.mxu0 0.0
  %621 = vmatprep.subr.mxu0 0.0
  %622 = vmatpush1.msra.mxu0 0.0
  %623 = vmatprep.subr.mxu0 0.0
  %624 = vmatpush1.msra.mxu0 0.0
  %625 = vmatprep.subr.mxu0 0.0
  %626 = vmatpush1.msra.mxu0 0.0
  %627 = vmatprep.subr.mxu0 0.0
  %628 = vmatpush1.msra.mxu0 0.0
  %629 = vmatprep.subr.mxu0 0.0
  %630 = vmatpush1.msra.mxu0 0.0
  %631 = vmatprep.subr.mxu0 0.0
  %632 = vmatpush1.msra.mxu0 %v599
  %633 = vmatprep.subr.mxu0 0.0
  %634 = vmatpush2.msra.mxu0 0.0
  %635 = vmatprep.subr.mxu0 0.0
  %636 = vmatpush2.msra.mxu0 0.0
  %637 = vmatprep.subr.mxu0 0.0
  %638 = vmatpush2.msra.mxu0 0.0
  %639 = vmatprep.subr.mxu0 0.0
  %640 = vmatpush2.msra.mxu0 0.0
  %641 = vmatprep.subr.mxu0 0.0
  %642 = vmatpush2.msra.mxu0 0.0
  %643 = vmatprep.subr.mxu0 0.0
  %644 = vmatpush2.msra.mxu0 0.0
  %645 = vmatprep.subr.mxu0 0.0
  %646 = vmatpush2.msra.mxu0 0.0
  %647 = vmatprep.subr.mxu0 0.0
  %648 = vmatpush2.msra.mxu0 0.0
  %649 = vmatprep.subr.mxu0 0.0
  %650 = vmatpush2.msra.mxu0 0.0
  %651 = vmatprep.subr.mxu0 0.0
  %652 = vmatpush2.msra.mxu0 0.0
  %653 = vmatprep.subr.mxu0 0.0
  %654 = vmatpush2.msra.mxu0 0.0
  %655 = vmatprep.subr.mxu0 0.0
  %656 = vmatpush2.msra.mxu0 0.0
  %657 = vmatprep.subr.mxu0 0.0
  %658 = vmatpush2.msra.mxu0 0.0
  %659 = vmatprep.subr.mxu0 0.0
  %660 = vmatpush2.msra.mxu0 0.0
  %661 = vmatprep.subr.mxu0 0.0
  %662 = vmatpush2.msra.mxu0 0.0
  %663 = vmatprep.subr.mxu0 0.0
  %664 = vmatpush2.msra.mxu0 0.0
  %665 = vmatprep.mubr.f32.mxu0 0.0
  %666 = vmatmul.mubr.f32.gmra.mxu0 %v596
  %v667 = vpop.f32.mrf.mxu0
  %v668 = vadd.f32 0.0, %v667
  %v669 = vpop.f32.mrf.mxu0
  %670 = vdwg.mxu0
  %v671 = vmul.f32 %v328, %v668
  %v672 = vsel %vm96, %v671, 0.0
  %v673 = vrot.slane %v672, 4
  %v674 = vadd.f32 %v672, %v673
  %v675 = vrot.slane %v674, 2
  %v676 = vadd.f32 %v674, %v675
  %v677 = vrot.slane %v676, 1
  %v678 = vadd.f32 %v676, %v677
  %v679 = vrcp.pop 4.0
  %v680 = vmul.f32 %v678, %v679
  %v681 = vsel %vm96, %v671, -inf
  %v682 = vrot.slane %v681, 4
  %v683 = vmax.f32 %v681, %v682
  %v684 = vrot.slane %v683, 2
  %v685 = vmax.f32 %v683, %v684
  %v686 = vrot.slane %v685, 1
  %v687 = vmax.f32 %v685, %v686
  %vm688 = vcmask 1040384
  %v689 = vsel %vm688, %v680, %v687
  %691 = vrot.lane.b32.xlu0 %v689, 24
  %v692 = vpop.permute.xlu0 %691
  %694 = vrot.lane.b32.xlu0 %v689, 16
  %v695 = vpop.permute.xlu0 %694
  %697 = vrot.lane.b32.xlu0 %v689, 8
  %v698 = vpop.permute.xlu0 %697
  %700 = vrot.lane.b32.xlu0 %v689, 120
  %v701 = vpop.permute.xlu0 %700
  %703 = vrot.lane.b32.xlu0 %v689, 112
  %v704 = vpop.permute.xlu0 %703
  %706 = vrot.lane.b32.xlu0 %v689, 104
  %v707 = vpop.permute.xlu0 %706
  %v710 = vrot.slane %v695, 6
  %v713 = vrot.slane %v698, 4
  %v715 = vrot.slane %v689, 2
  %v718 = vrot.slane %v704, 6
  %v721 = vrot.slane %v707, 4
  %v723 = vsel %vm510, %v692, %v710
  %v724 = vsel %vm96, %v723, %v713
  %vm725 = vcmask 1045504
  %v726 = vsel %vm725, %v724, %v715
  %v727 = vsel %vm510, %v701, %v718
  %v728 = vsel %vm96, %v727, %v721
  %731 = vrot.lane.b32.xlu0 %v726, 3
  %v732 = vpop.permute.xlu0 %731
  %733 = vrot.lane.b32.xlu0 %v728, 3
  %v734 = vpop.permute.xlu0 %733
  %737 = vrot.lane.b32.xlu0 %v726, 2
  %v738 = vpop.permute.xlu0 %737
  %739 = vrot.lane.b32.xlu0 %v728, 2
  %v740 = vpop.permute.xlu0 %739
  %743 = vrot.lane.b32.xlu0 %v726, 1
  %v744 = vpop.permute.xlu0 %743
  %745 = vrot.lane.b32.xlu0 %v728, 1
  %v746 = vpop.permute.xlu0 %745
  %749 = vrot.lane.b32.xlu0 %v726, 127
  %v750 = vpop.permute.xlu0 %749
  %751 = vrot.lane.b32.xlu0 %v728, 127
  %v752 = vpop.permute.xlu0 %751
  %755 = vrot.lane.b32.xlu0 %v726, 126
  %v756 = vpop.permute.xlu0 %755
  %757 = vrot.lane.b32.xlu0 %v728, 126
  %v758 = vpop.permute.xlu0 %757
  %761 = vrot.lane.b32.xlu0 %v726, 125
  %v762 = vpop.permute.xlu0 %761
  %763 = vrot.lane.b32.xlu0 %v728, 125
  %v764 = vpop.permute.xlu0 %763
  %v769 = vrot.slane %v738, 2
  %v770 = vrot.slane %v740, 2
  %v771 = vsel %vm725, %v769, %v770
  %v777 = vrot.slane %v744, 4
  %v778 = vrot.slane %v746, 4
  %v779 = vsel %vm96, %v777, %v778
  %v783 = vrot.slane %v726, 6
  %v784 = vrot.slane %v728, 6
  %v785 = vsel %vm510, %v783, %v784
  %v790 = vrot.slane %v756, 2
  %v791 = vrot.slane %v758, 2
  %v792 = vsel %vm725, %v790, %v791
  %v798 = vrot.slane %v762, 4
  %v799 = vrot.slane %v764, 4
  %v800 = vsel %vm96, %v798, %v799
  %v804 = vsel %vm725, %v734, %v769
  %v805 = vsel %vm96, %v770, %v777
  %v806 = vsel %vm510, %v778, %v783
  %v807 = vsel %vm725, %v752, %v790
  %v808 = vsel %vm96, %v791, %v798
  %v809 = vld [vmem:[%s2] sm:$0xff]
  %v810 = vld [vmem:[%s2 + $0x8] sm:$0xff]
  %v811 = vld [vmem:[%s2 + $0x10] sm:$0xff]
  %v812 = vld [vmem:[%s2 + $0x18] sm:$0xff]
  %v813 = vld [vmem:[%s2 + $0x20] sm:$0xff]
  %v814 = vld [vmem:[%s2 + $0x28] sm:$0xff]
  %v815 = vld [vmem:[%s2 + $0x30] sm:$0xff]
  %v816 = vld [vmem:[%s2 + $0x38] sm:$0xff]
  %v817 = vld [vmem:[%s2 + $0x40] sm:$0xff]
  %v818 = vld [vmem:[%s2 + $0x48] sm:$0xff]
  %v819 = vld [vmem:[%s2 + $0x50] sm:$0xff]
  %v820 = vld [vmem:[%s2 + $0x58] sm:$0xff]
  %v821 = vld [vmem:[%s2 + $0x60] sm:$0x3]
  %v822 = vmul.f32 %v732, %v809
  %v823 = vmul.f32 %v804, %v810
  %v824 = vmul.f32 %v771, %v811
  %v825 = vmul.f32 %v805, %v812
  %v826 = vmul.f32 %v779, %v813
  %v827 = vmul.f32 %v806, %v814
  %v828 = vmul.f32 %v785, %v815
  %v829 = vmul.f32 %v750, %v816
  %v830 = vmul.f32 %v807, %v817
  %v831 = vmul.f32 %v792, %v818
  %v832 = vmul.f32 %v808, %v819
  %v833 = vmul.f32 %v800, %v820
  %v834 = vmul.f32 %v799, %v821
  %v835 = vld [vmem:[%s11] sm:$0x1]
  %v836 = vld [vmem:[#allocation2] sm:$0x1]
  %838 = vset.pattern.permute.xlu0 0
  %839 = vperm.xlu0 %838, %v836
  %v840 = vpop.permute.xlu0 %839
  %v842 = vlaneseq
  %v843 = vshrl.u32 %v842, 7
  %v844 = vsub.s32 0, %v843
  %v845 = vrot.slane %v840, %v844
  %vm846 = vcmask 801792
  %v848 = vsel %vm846, %v835, 0
  %v851 = vsel %vm510, %v834, 0
  %853 = vmatprep.subr.mxu0 0.0
  %854 = vmatpush1.msra.mxu0 0.0
  %855 = vmatprep.subr.mxu0 0.0
  %856 = vmatpush1.msra.mxu0 0.0
  %857 = vmatprep.subr.mxu0 0.0
  %858 = vmatpush1.msra.mxu0 0.0
  %859 = vmatprep.subr.mxu0 0.0
  %860 = vmatpush1.msra.mxu0 %v851
  %861 = vmatprep.subr.mxu0 0.0
  %862 = vmatpush1.msra.mxu0 %v833
  %863 = vmatprep.subr.mxu0 0.0
  %864 = vmatpush1.msra.mxu0 %v832
  %865 = vmatprep.subr.mxu0 0.0
  %866 = vmatpush1.msra.mxu0 %v831
  %867 = vmatprep.subr.mxu0 0.0
  %868 = vmatpush1.msra.mxu0 %v830
  %869 = vmatprep.subr.mxu0 0.0
  %870 = vmatpush1.msra.mxu0 %v829
  %871 = vmatprep.subr.mxu0 0.0
  %872 = vmatpush1.msra.mxu0 %v828
  %873 = vmatprep.subr.mxu0 0.0
  %874 = vmatpush1.msra.mxu0 %v827
  %875 = vmatprep.subr.mxu0 0.0
  %876 = vmatpush1.msra.mxu0 %v826
  %877 = vmatprep.subr.mxu0 0.0
  %878 = vmatpush1.msra.mxu0 %v825
  %879 = vmatprep.subr.mxu0 0.0
  %880 = vmatpush1.msra.mxu0 %v824
  %881 = vmatprep.subr.mxu0 0.0
  %882 = vmatpush1.msra.mxu0 %v823
  %883 = vmatprep.subr.mxu0 0.0
  %884 = vmatpush1.msra.mxu0 %v822
  %885 = vmatprep.subr.mxu0 0.0
  %886 = vmatpush2.msra.mxu0 0.0
  %887 = vmatprep.subr.mxu0 0.0
  %888 = vmatpush2.msra.mxu0 0.0
  %889 = vmatprep.subr.mxu0 0.0
  %890 = vmatpush2.msra.mxu0 0.0
  %891 = vmatprep.subr.mxu0 0.0
  %892 = vmatpush2.msra.mxu0 0.0
  %893 = vmatprep.subr.mxu0 0.0
  %894 = vmatpush2.msra.mxu0 0.0
  %895 = vmatprep.subr.mxu0 0.0
  %896 = vmatpush2.msra.mxu0 0.0
  %897 = vmatprep.subr.mxu0 0.0
  %898 = vmatpush2.msra.mxu0 0.0
  %899 = vmatprep.subr.mxu0 0.0
  %900 = vmatpush2.msra.mxu0 0.0
  %901 = vmatprep.subr.mxu0 0.0
  %902 = vmatpush2.msra.mxu0 0.0
  %903 = vmatprep.subr.mxu0 0.0
  %904 = vmatpush2.msra.mxu0 0.0
  %905 = vmatprep.subr.mxu0 0.0
  %906 = vmatpush2.msra.mxu0 0.0
  %907 = vmatprep.subr.mxu0 0.0
  %908 = vmatpush2.msra.mxu0 0.0
  %909 = vmatprep.subr.mxu0 0.0
  %910 = vmatpush2.msra.mxu0 0.0
  %911 = vmatprep.subr.mxu0 0.0
  %912 = vmatpush2.msra.mxu0 0.0
  %913 = vmatprep.subr.mxu0 0.0
  %914 = vmatpush2.msra.mxu0 0.0
  %915 = vmatprep.subr.mxu0 0.0
  %916 = vmatpush2.msra.mxu0 0.0
  %917 = vmatprep.mubr.f32.mxu0 0.0
  %918 = vmatmul.mubr.f32.gmra.mxu0 %v848
  %v919 = vpop.f32.mrf.mxu0
  %v920 = vadd.f32 %v845, %v919
  %v921 = vpop.f32.mrf.mxu0
  %922 = vdwg.mxu0
  %v923 = vxor.u32 %v920, 2147483648
  %v924 = vmul.f32 %v923, 1.442695
  %v925 = vpow.pop %v924
  %v926 = vadd.f32 %v925, 1.0
  %v927 = vrcp.pop %v926
  %v928 = vmul.f32 1.0, %v927
  %v929 = vlaneseq
  %v930 = vshrl.u32 %v929, 7
  %v931 = vsub.s32 0, %v930
  %v932 = vrot.slane %v928, %v931
  %v933 = vmul.f32 %v671, %v932
  %v934 = vld [vmem:[%s13] sm:$0xf]
  %936 = vset.pattern.permute.xlu0 0
  %937 = vperm.xlu0 %936, %v934
  %v938 = vpop.permute.xlu0 %937
  %v940 = vmul.f32 %v933, %v938
  %v941 = vld [vmem:[%s14] sm:$0xf]
  %943 = vset.pattern.permute.xlu0 0
  %944 = vperm.xlu0 %943, %v941
  %v945 = vpop.permute.xlu0 %944
  %v947 = vadd.f32 %v940, %v945
  %949 = vrot.lane.b32.xlu0 %v947, 127
  %v950 = vpop.permute.xlu0 %949
  %v952 = vmax.f32 %v947, %v950
  %954 = vrot.lane.b32.xlu0 %v952, 120
  %v955 = vpop.permute.xlu0 %954
  %v957 = vmax.f32 %v952, %v955
  %v958 = vld [vmem:[%s15] sm:$0xff]
  %v959 = vld [vmem:[%s15 + $0x8] sm:$0xff]
  %v960 = vld [vmem:[%s15 + $0x10] sm:$0xff]
  %v961 = vld [vmem:[%s15 + $0x18] sm:$0xff]
  %v962 = vld [vmem:[%s15 + $0x20] sm:$0xff]
  %v963 = vld [vmem:[%s15 + $0x28] sm:$0xff]
  %v964 = vld [vmem:[%s15 + $0x30] sm:$0xff]
  %v965 = vld [vmem:[%s15 + $0x38] sm:$0xff]
  %v967 = vsel %vm428, %v958, 0
  %v970 = vsel %vm428, %v959, 0
  %v973 = vsel %vm428, %v960, 0
  %v976 = vsel %vm428, %v961, 0
  %v979 = vsel %vm428, %v962, 0
  %v982 = vsel %vm428, %v963, 0
  %v985 = vsel %vm428, %v964, 0
  %v988 = vsel %vm428, %v965, 0
  %v991 = vsel %vm96, %v957, 0
  %993 = vmatprep.subr.mxu0 0.0
  %994 = vmatpush1.msra.mxu0 0.0
  %995 = vmatprep.subr.mxu0 0.0
  %996 = vmatpush1.msra.mxu0 0.0
  %997 = vmatprep.subr.mxu0 0.0
  %998 = vmatpush1.msra.mxu0 0.0
  %999 = vmatprep.subr.mxu0 0.0
  %1000 = vmatpush1.msra.mxu0 0.0
  %1001 = vmatprep.subr.mxu0 0.0
  %1002 = vmatpush1.msra.mxu0 0.0
  %1003 = vmatprep.subr.mxu0 0.0
  %1004 = vmatpush1.msra.mxu0 0.0
  %1005 = vmatprep.subr.mxu0 0.0
  %1006 = vmatpush1.msra.mxu0 0.0
  %1007 = vmatprep.subr.mxu0 0.0
  %1008 = vmatpush1.msra.mxu0 0.0
  %1009 = vmatprep.subr.mxu0 0.0
  %1010 = vmatpush1.msra.mxu0 0.0
  %1011 = vmatprep.subr.mxu0 0.0
  %1012 = vmatpush1.msra.mxu0 0.0
  %1013 = vmatprep.subr.mxu0 0.0
  %1014 = vmatpush1.msra.mxu0 0.0
  %1015 = vmatprep.subr.mxu0 0.0
  %1016 = vmatpush1.msra.mxu0 0.0
  %1017 = vmatprep.subr.mxu0 0.0
  %1018 = vmatpush1.msra.mxu0 0.0
  %1019 = vmatprep.subr.mxu0 0.0
  %1020 = vmatpush1.msra.mxu0 0.0
  %1021 = vmatprep.subr.mxu0 0.0
  %1022 = vmatpush1.msra.mxu0 0.0
  %1023 = vmatprep.subr.mxu0 0.0
  %1024 = vmatpush1.msra.mxu0 %v991
  %1025 = vmatprep.subr.mxu0 0.0
  %1026 = vmatpush2.msra.mxu0 0.0
  %1027 = vmatprep.subr.mxu0 0.0
  %1028 = vmatpush2.msra.mxu0 0.0
  %1029 = vmatprep.subr.mxu0 0.0
  %1030 = vmatpush2.msra.mxu0 0.0
  %1031 = vmatprep.subr.mxu0 0.0
  %1032 = vmatpush2.msra.mxu0 0.0
  %1033 = vmatprep.subr.mxu0 0.0
  %1034 = vmatpush2.msra.mxu0 0.0
  %1035 = vmatprep.subr.mxu0 0.0
  %1036 = vmatpush2.msra.mxu0 0.0
  %1037 = vmatprep.subr.mxu0 0.0
  %1038 = vmatpush2.msra.mxu0 0.0
  %1039 = vmatprep.subr.mxu0 0.0
  %1040 = vmatpush2.msra.mxu0 0.0
  %1041 = vmatprep.subr.mxu0 0.0
  %1042 = vmatpush2.msra.mxu0 0.0
  %1043 = vmatprep.subr.mxu0 0.0
  %1044 = vmatpush2.msra.mxu0 0.0
  %1045 = vmatprep.subr.mxu0 0.0
  %1046 = vmatpush2.msra.mxu0 0.0
  %1047 = vmatprep.subr.mxu0 0.0
  %1048 = vmatpush2.msra.mxu0 0.0
  %1049 = vmatprep.subr.mxu0 0.0
  %1050 = vmatpush2.msra.mxu0 0.0
  %1051 = vmatprep.subr.mxu0 0.0
  %1052 = vmatpush2.msra.mxu0 0.0
  %1053 = vmatprep.subr.mxu0 0.0
  %1054 = vmatpush2.msra.mxu0 0.0
  %1055 = vmatprep.subr.mxu0 0.0
  %1056 = vmatpush2.msra.mxu0 0.0
  %1057 = vmatprep.mubr.f32.mxu0 0.0
  %1058 = vmatmul.mubr.f32.gmra.mxu0 %v967
  %v1059 = vpop.f32.mrf.mxu0
  %v1060 = vadd.f32 0.0, %v1059
  %v1061 = vpop.f32.mrf.mxu0
  %1062 = vmatprep.mubr.f32.mxu0 0.0
  %1063 = vmatmul.mubr.f32.gmra.mxu0 %v970
  %v1064 = vpop.f32.mrf.mxu0
  %v1065 = vadd.f32 0.0, %v1064
  %v1066 = vpop.f32.mrf.mxu0
  %1067 = vmatprep.mubr.f32.mxu0 0.0
  %1068 = vmatmul.mubr.f32.gmra.mxu0 %v973
  %v1069 = vpop.f32.mrf.mxu0
  %v1070 = vadd.f32 0.0, %v1069
  %v1071 = vpop.f32.mrf.mxu0
  %1072 = vmatprep.mubr.f32.mxu0 0.0
  %1073 = vmatmul.mubr.f32.gmra.mxu0 %v976
  %v1074 = vpop.f32.mrf.mxu0
  %v1075 = vadd.f32 0.0, %v1074
  %v1076 = vpop.f32.mrf.mxu0
  %1077 = vmatprep.mubr.f32.mxu0 0.0
  %1078 = vmatmul.mubr.f32.gmra.mxu0 %v979
  %v1079 = vpop.f32.mrf.mxu0
  %v1080 = vadd.f32 0.0, %v1079
  %v1081 = vpop.f32.mrf.mxu0
  %1082 = vmatprep.mubr.f32.mxu0 0.0
  %1083 = vmatmul.mubr.f32.gmra.mxu0 %v982
  %v1084 = vpop.f32.mrf.mxu0
  %v1085 = vadd.f32 0.0, %v1084
  %v1086 = vpop.f32.mrf.mxu0
  %1087 = vmatprep.mubr.f32.mxu0 0.0
  %1088 = vmatmul.mubr.f32.gmra.mxu0 %v985
  %v1089 = vpop.f32.mrf.mxu0
  %v1090 = vadd.f32 0.0, %v1089
  %v1091 = vpop.f32.mrf.mxu0
  %1092 = vmatprep.mubr.f32.mxu0 0.0
  %1093 = vmatmul.mubr.f32.gmra.mxu0 %v988
  %v1094 = vpop.f32.mrf.mxu0
  %v1095 = vadd.f32 0.0, %v1094
  %v1096 = vpop.f32.mrf.mxu0
  %1097 = vdwg.mxu0
  %v1098 = vld [vmem:[%s16] sm:$0xff]
  %v1099 = vld [vmem:[%s16 + $0x8] sm:$0xff]
  %v1100 = vld [vmem:[%s16 + $0x10] sm:$0xff]
  %v1101 = vld [vmem:[%s16 + $0x18] sm:$0xff]
  %v1102 = vld [vmem:[%s16 + $0x20] sm:$0xff]
  %v1103 = vld [vmem:[%s16 + $0x28] sm:$0xff]
  %v1104 = vld [vmem:[%s16 + $0x30] sm:$0xff]
  %v1105 = vld [vmem:[%s16 + $0x38] sm:$0xff]
  %v1106 = vmul.f32 %v1060, %v1098
  %v1107 = vmul.f32 %v1065, %v1099
  %v1108 = vmul.f32 %v1070, %v1100
  %v1109 = vmul.f32 %v1075, %v1101
  %v1110 = vmul.f32 %v1080, %v1102
  %v1111 = vmul.f32 %v1085, %v1103
  %v1112 = vmul.f32 %v1090, %v1104
  %v1113 = vmul.f32 %v1095, %v1105
  %1114 = vmatprep.subr.mxu0 0.0
  %1115 = vmatpush1.msra.mxu0 %v86
  %1116 = vmatprep.subr.mxu0 0.0
  %1117 = vmatpush1.msra.mxu0 %v85
  %1118 = vmatprep.subr.mxu0 0.0
  %1119 = vmatpush1.msra.mxu0 %v84
  %1120 = vmatprep.subr.mxu0 0.0
  %1121 = vmatpush1.msra.mxu0 %v83
  %1122 = vmatprep.subr.mxu0 0.0
  %1123 = vmatpush1.msra.mxu0 %v82
  %1124 = vmatprep.subr.mxu0 0.0
  %1125 = vmatpush1.msra.mxu0 %v81
  %1126 = vmatprep.subr.mxu0 0.0
  %1127 = vmatpush1.msra.mxu0 %v80
  %1128 = vmatprep.subr.mxu0 0.0
  %1129 = vmatpush1.msra.mxu0 %v79
  %1130 = vmatprep.subr.mxu0 0.0
  %1131 = vmatpush1.msra.mxu0 %v78
  %1132 = vmatprep.subr.mxu0 0.0
  %1133 = vmatpush1.msra.mxu0 %v77
  %1134 = vmatprep.subr.mxu0 0.0
  %1135 = vmatpush1.msra.mxu0 %v76
  %1136 = vmatprep.subr.mxu0 0.0
  %1137 = vmatpush1.msra.mxu0 %v75
  %1138 = vmatprep.subr.mxu0 0.0
  %1139 = vmatpush1.msra.mxu0 %v74
  %1140 = vmatprep.subr.mxu0 0.0
  %1141 = vmatpush1.msra.mxu0 %v73
  %1142 = vmatprep.subr.mxu0 0.0
  %1143 = vmatpush1.msra.mxu0 %v72
  %1144 = vmatprep.subr.mxu0 0.0
  %1145 = vmatpush1.msra.mxu0 %v71
  %1146 = vmatprep.subr.mxu0 0.0
  %1147 = vmatpush2.msra.mxu0 0.0
  %1148 = vmatprep.subr.mxu0 0.0
  %1149 = vmatpush2.msra.mxu0 0.0
  %1150 = vmatprep.subr.mxu0 0.0
  %1151 = vmatpush2.msra.mxu0 0.0
  %1152 = vmatprep.subr.mxu0 0.0
  %1153 = vmatpush2.msra.mxu0 0.0
  %1154 = vmatprep.subr.mxu0 0.0
  %1155 = vmatpush2.msra.mxu0 0.0
  %1156 = vmatprep.subr.mxu0 0.0
  %1157 = vmatpush2.msra.mxu0 0.0
  %1158 = vmatprep.subr.mxu0 0.0
  %1159 = vmatpush2.msra.mxu0 0.0
  %1160 = vmatprep.subr.mxu0 0.0
  %1161 = vmatpush2.msra.mxu0 0.0
  %1162 = vmatprep.subr.mxu0 0.0
  %1163 = vmatpush2.msra.mxu0 0.0
  %1164 = vmatprep.subr.mxu0 0.0
  %1165 = vmatpush2.msra.mxu0 0.0
  %1166 = vmatprep.subr.mxu0 0.0
  %1167 = vmatpush2.msra.mxu0 0.0
  %1168 = vmatprep.subr.mxu0 0.0
  %1169 = vmatpush2.msra.mxu0 0.0
  %1170 = vmatprep.subr.mxu0 0.0
  %1171 = vmatpush2.msra.mxu0 0.0
  %1172 = vmatprep.subr.mxu0 0.0
  %1173 = vmatpush2.msra.mxu0 0.0
  %1174 = vmatprep.subr.mxu0 0.0
  %1175 = vmatpush2.msra.mxu0 0.0
  %1176 = vmatprep.subr.mxu0 0.0
  %1177 = vmatpush2.msra.mxu0 0.0
  %1178 = vmatprep.mubr.f32.mxu0 0.0
  %1179 = vmatmul.mubr.f32.gmra.mxu0 %v1106
  %v1180 = vpop.f32.mrf.mxu0
  %v1181 = vadd.f32 0.0, %v1180
  %v1182 = vpop.f32.mrf.mxu0
  %1183 = vmatprep.mubr.f32.mxu0 0.0
  %1184 = vmatmul.mubr.f32.gmra.mxu0 %v1107
  %v1185 = vpop.f32.mrf.mxu0
  %v1186 = vadd.f32 0.0, %v1185
  %v1187 = vpop.f32.mrf.mxu0
  %1188 = vmatprep.mubr.f32.mxu0 0.0
  %1189 = vmatmul.mubr.f32.gmra.mxu0 %v1108
  %v1190 = vpop.f32.mrf.mxu0
  %v1191 = vadd.f32 0.0, %v1190
  %v1192 = vpop.f32.mrf.mxu0
  %1193 = vmatprep.mubr.f32.mxu0 0.0
  %1194 = vmatmul.mubr.f32.gmra.mxu0 %v1109
  %v1195 = vpop.f32.mrf.mxu0
  %v1196 = vadd.f32 0.0, %v1195
  %v1197 = vpop.f32.mrf.mxu0
  %1198 = vmatprep.mubr.f32.mxu0 0.0
  %1199 = vmatmul.mubr.f32.gmra.mxu0 %v1110
  %v1200 = vpop.f32.mrf.mxu0
  %v1201 = vadd.f32 0.0, %v1200
  %v1202 = vpop.f32.mrf.mxu0
  %1203 = vmatprep.mubr.f32.mxu0 0.0
  %1204 = vmatmul.mubr.f32.gmra.mxu0 %v1111
  %v1205 = vpop.f32.mrf.mxu0
  %v1206 = vadd.f32 0.0, %v1205
  %v1207 = vpop.f32.mrf.mxu0
  %1208 = vmatprep.mubr.f32.mxu0 0.0
  %1209 = vmatmul.mubr.f32.gmra.mxu0 %v1112
  %v1210 = vpop.f32.mrf.mxu0
  %v1211 = vadd.f32 0.0, %v1210
  %v1212 = vpop.f32.mrf.mxu0
  %1213 = vmatprep.mubr.f32.mxu0 0.0
  %1214 = vmatmul.mubr.f32.gmra.mxu0 %v1113
  %v1215 = vpop.f32.mrf.mxu0
  %v1216 = vadd.f32 0.0, %v1215
  %v1217 = vpop.f32.mrf.mxu0
  %1218 = vdwg.mxu0
  %v1219 = vld [vmem:[%s17] sm:$0xff]
  %v1220 = vld [vmem:[%s17 + $0x8] sm:$0x3]
  %v1221 = vld [vmem:[%s18] sm:$0xff]
  %v1222 = vld [vmem:[%s18 + $0x8] sm:$0x3]
  %1224 = vset.pattern.permute.xlu0 0
  %1225 = vperm.xlu0 %1224, %v1221
  %v1226 = vpop.permute.xlu0 %1225
  %1229 = vset.pattern.permute.xlu0 0
  %1230 = vperm.xlu0 %1229, %v1222
  %v1231 = vpop.permute.xlu0 %1230
  %vm1233 = vcmask 523264
  %v1235 = vsel %vm1233, %v1219, 0
  %v1238 = vsel %vm1233, %v1220, 0
  %1240 = vmatprep.subr.mxu0 0.0
  %1241 = vmatpush1.msra.mxu0 0.0
  %1242 = vmatprep.subr.mxu0 0.0
  %1243 = vmatpush1.msra.mxu0 0.0
  %1244 = vmatprep.subr.mxu0 0.0
  %1245 = vmatpush1.msra.mxu0 0.0
  %1246 = vmatprep.subr.mxu0 0.0
  %1247 = vmatpush1.msra.mxu0 0.0
  %1248 = vmatprep.subr.mxu0 0.0
  %1249 = vmatpush1.msra.mxu0 0.0
  %1250 = vmatprep.subr.mxu0 0.0
  %1251 = vmatpush1.msra.mxu0 0.0
  %1252 = vmatprep.subr.mxu0 0.0
  %1253 = vmatpush1.msra.mxu0 0.0
  %1254 = vmatprep.subr.mxu0 0.0
  %1255 = vmatpush1.msra.mxu0 0.0
  %1256 = vmatprep.subr.mxu0 0.0
  %1257 = vmatpush1.msra.mxu0 %v1216
  %1258 = vmatprep.subr.mxu0 0.0
  %1259 = vmatpush1.msra.mxu0 %v1211
  %1260 = vmatprep.subr.mxu0 0.0
  %1261 = vmatpush1.msra.mxu0 %v1206
  %1262 = vmatprep.subr.mxu0 0.0
  %1263 = vmatpush1.msra.mxu0 %v1201
  %1264 = vmatprep.subr.mxu0 0.0
  %1265 = vmatpush1.msra.mxu0 %v1196
  %1266 = vmatprep.subr.mxu0 0.0
  %1267 = vmatpush1.msra.mxu0 %v1191
  %1268 = vmatprep.subr.mxu0 0.0
  %1269 = vmatpush1.msra.mxu0 %v1186
  %1270 = vmatprep.subr.mxu0 0.0
  %1271 = vmatpush1.msra.mxu0 %v1181
  %1272 = vmatprep.subr.mxu0 0.0
  %1273 = vmatpush2.msra.mxu0 0.0
  %1274 = vmatprep.subr.mxu0 0.0
  %1275 = vmatpush2.msra.mxu0 0.0
  %1276 = vmatprep.subr.mxu0 0.0
  %1277 = vmatpush2.msra.mxu0 0.0
  %1278 = vmatprep.subr.mxu0 0.0
  %1279 = vmatpush2.msra.mxu0 0.0
  %1280 = vmatprep.subr.mxu0 0.0
  %1281 = vmatpush2.msra.mxu0 0.0
  %1282 = vmatprep.subr.mxu0 0.0
  %1283 = vmatpush2.msra.mxu0 0.0
  %1284 = vmatprep.subr.mxu0 0.0
  %1285 = vmatpush2.msra.mxu0 0.0
  %1286 = vmatprep.subr.mxu0 0.0
  %1287 = vmatpush2.msra.mxu0 0.0
  %1288 = vmatprep.subr.mxu0 0.0
  %1289 = vmatpush2.msra.mxu0 0.0
  %1290 = vmatprep.subr.mxu0 0.0
  %1291 = vmatpush2.msra.mxu0 0.0
  %1292 = vmatprep.subr.mxu0 0.0
  %1293 = vmatpush2.msra.mxu0 0.0
  %1294 = vmatprep.subr.mxu0 0.0
  %1295 = vmatpush2.msra.mxu0 0.0
  %1296 = vmatprep.subr.mxu0 0.0
  %1297 = vmatpush2.msra.mxu0 0.0
  %1298 = vmatprep.subr.mxu0 0.0
  %1299 = vmatpush2.msra.mxu0 0.0
  %1300 = vmatprep.subr.mxu0 0.0
  %1301 = vmatpush2.msra.mxu0 0.0
  %1302 = vmatprep.subr.mxu0 0.0
  %1303 = vmatpush2.msra.mxu0 0.0
  %1304 = vmatprep.mubr.f32.mxu0 0.0
  %1305 = vmatmul.mubr.f32.gmra.mxu0 %v1235
  %v1306 = vpop.f32.mrf.mxu0
  %v1307 = vadd.f32 %v1226, %v1306
  %v1308 = vpop.f32.mrf.mxu0
  %1309 = vmatprep.mubr.f32.mxu0 0.0
  %1310 = vmatmul.mubr.f32.gmra.mxu0 %v1238
  %v1311 = vpop.f32.mrf.mxu0
  %v1312 = vadd.f32 %v1231, %v1311
  %v1313 = vpop.f32.mrf.mxu0
  %1314 = vdwg.mxu0
  %1315 = vst.msk [vmem:[%s19] sm:$0xff] %vm425, %v1307
  %vm1316 = vcmask 9216
  %1317 = vst.msk [vmem:[%s19 + $0x8] sm:$0x3] %vm1316, %v1312
  // Predicated region
  $region78: #{tpu_custom_call.1} parent=0 // pred_check
    _
  $region79: #{tpu_custom_call.1} parent=0 // pred_check_branch
    %1319 = sbr.rel (0) target = $region81
  $region80: #{tpu_custom_call.1} parent=0 // pred_region
    _
  $region81: #{tpu_custom_call.1} parent=0 // pred_fallthru
    _
  // Predicated region
  $region82: #{tpu_custom_call.1} parent=0 // pred_check
    _
  $region83: #{tpu_custom_call.1} parent=0 // pred_check_branch
    %1321 = sbr.rel (0) target = $region85
  $region84: #{tpu_custom_call.1} parent=0 // pred_region
    _
  $region85: #{tpu_custom_call.1} parent=0 // pred_fallthru
    _

</llo_original>
